<compile_context>
chip_gen: v5e
topology: v5e:2x2
jax: 0.10.0
libtpu: 0.0.40
codegen_flags: <defaults>
</compile_context>

<pallas_src>
import math

import jax
import jax.numpy as jnp
from jax.experimental import pallas as pl
from jax.experimental.pallas import tpu as pltpu

# ---- small synthetic config --------------------------------------------------
B, S, H = 2, 8, 32          # batch, seq len, hidden size
NH = 4                      # attention heads
DH = H // NH                # head dim
INTER = 64                  # FFN intermediate size
BOTTLENECK = 8              # adapter bottleneck
FUSED = INTER + BOTTLENECK  # fused FFN+adapter inner width (72)
ADAPTER_SCALE = 0.1
NUM_LAYERS = 2
VOCAB = 100
MAX_POS = 64
TYPE_VOCAB = 2
NUM_CLASSES = 1
SCORE_RANGE = 5.0
LN_EPS = 1e-12
PAD_ID = 1                  # RoBERTa padding_idx
BS = B * S
ATT_SCALE = 1.0 / math.sqrt(DH)
VEC_W = 3 * H               # lane width of the packed per-layer vector slab
OUT_W = 128                 # lane-padded output width


# ---- in-kernel helpers -------------------------------------------------------
def _layernorm(x, g, b, eps=LN_EPS):
    mu = jnp.mean(x, axis=-1, keepdims=True)
    var = jnp.mean((x - mu) ** 2, axis=-1, keepdims=True)
    return (x - mu) * jax.lax.rsqrt(var + eps) * g + b


# ---- fused per-batch forward kernel ------------------------------------------
def fused_forward_kernel(emb_ref, misc_ref, head_ref,
                         wqkv_ref, wo_ref, wfi_ref, wfo_ref, vec_ref,
                         out_ref):
    head = head_ref[...]                       # [4, H]: embLN g, embLN b, wc, bc
    misc = misc_ref[0]                         # [1, OUT_W]
    kbias = misc[:, 0:S]                       # [1, S] additive key-position bias
    label = misc[:, S:S + 1]                   # [1, 1]

    # embeddings LayerNorm
    x = _layernorm(emb_ref[...], head[0:1], head[1:2])                # [S, H]

    for l in range(NUM_LAYERS):                                       # static unroll
        vec = vec_ref[l]                                              # [8, 3H]
        b_qkv = vec[0:1, 0:3 * H]
        b_o = vec[1:2, 0:H]
        ln1g, ln1b = vec[2:3, 0:H], vec[3:4, 0:H]
        b_fi = vec[4:5, 0:FUSED]
        b_fo = vec[5:6, 0:H]
        ln2g, ln2b = vec[6:7, 0:H], vec[7:8, 0:H]

        # ---- self-attention --------------------------------------------------
        qkv = jnp.dot(x, wqkv_ref[l],
                      preferred_element_type=jnp.float32) + b_qkv     # [S, 3H]
        q_h = jnp.stack([qkv[:, h * DH:(h + 1) * DH] for h in range(NH)])
        k_h = jnp.stack([qkv[:, H + h * DH:H + (h + 1) * DH] for h in range(NH)])
        v_h = jnp.stack([qkv[:, 2 * H + h * DH:2 * H + (h + 1) * DH] for h in range(NH)])

        s = jnp.einsum('hqd,hkd->hqk', q_h, k_h,
                       preferred_element_type=jnp.float32) * ATT_SCALE  # [NH,S,S]
        s = s + kbias                              # broadcast over heads & queries
        s = s - jnp.max(s, axis=-1, keepdims=True)  # one batched softmax pass
        p = jnp.exp(s)
        p = p / jnp.sum(p, axis=-1, keepdims=True)
        ctx = jnp.einsum('hqk,hkd->hqd', p, v_h,
                         preferred_element_type=jnp.float32)            # [NH,S,DH]
        ctx_flat = jnp.concatenate([ctx[h] for h in range(NH)], axis=-1)  # [S, H]
        attn = jnp.dot(ctx_flat, wo_ref[l],
                       preferred_element_type=jnp.float32) + b_o
        h1 = _layernorm(attn + x, ln1g, ln1b)

        # ---- fused FFN + parallel AdaptMLP adapter ----------------------------
        pre = jnp.dot(h1, wfi_ref[l],
                      preferred_element_type=jnp.float32) + b_fi        # [S, FUSED]
        lane = jax.lax.broadcasted_iota(jnp.int32, pre.shape, 1)
        # TODO(synk): HF RoBERTa uses exact (erf) GELU; tanh approximation here.
        act = jnp.where(lane < INTER,
                        jax.nn.gelu(pre, approximate=True),
                        jnp.maximum(pre, 0.0))
        fused = jnp.dot(act, wfo_ref[l],
                        preferred_element_type=jnp.float32) + b_fo      # ffn+adapter
        x = _layernorm(fused + h1, ln2g, ln2b)

    # classifier on CLS (row 0 of this batch element) + sigmoid scaling + MSE
    cls = x[0:1, :]                                                     # [1, H]
    logit = jnp.sum(cls * head[2:3], axis=-1, keepdims=True) + head[3:4, 0:1]
    score = SCORE_RANGE * jax.nn.sigmoid(logit)                         # [1, 1]
    sqerr = (score - label) ** 2

    lane_o = jax.lax.broadcasted_iota(jnp.int32, (1, OUT_W), 1)
    out_ref[0] = jnp.where(lane_o == 0, score,
                           jnp.where(lane_o == 1, sqerr, 0.0))


# ---- deterministic parameter init (synthetic; packed layout) -----------------
def init_params(key):
    keys = jax.random.split(key, 32)
    kit = iter(keys)

    def dense(shape):
        return 0.02 * jax.random.normal(next(kit), shape, dtype=jnp.float32)

    def vrow(v):
        return jnp.zeros((VEC_W,), jnp.float32).at[: v.shape[0]].set(v)

    w_qkv, w_o, w_fi, w_fo, vec = [], [], [], [], []
    for _ in range(NUM_LAYERS):
        wq, wk, wv = dense((H, H)), dense((H, H)), dense((H, H))
        w_qkv.append(jnp.concatenate([wq, wk, wv], axis=1))             # [H, 3H]
        w_o.append(dense((H, H)))                                       # [H, H]
        wi, wd = dense((H, INTER)), dense((H, BOTTLENECK))
        w_fi.append(jnp.concatenate([wi, wd], axis=1))                  # [H, FUSED]
        wo2, wu = dense((INTER, H)), dense((BOTTLENECK, H))
        # adapter scale folded into the up-projection weight (and its bias).
        w_fo.append(jnp.concatenate([wo2, ADAPTER_SCALE * wu], axis=0))  # [FUSED, H]

        b_qkv = jnp.zeros(3 * H)
        b_o = jnp.zeros(H)
        ln1g, ln1b = jnp.ones(H), jnp.zeros(H)
        b_fi = jnp.zeros(FUSED)                        # bi ++ bd
        b_fo = jnp.zeros(H)                            # bo2 + ADAPTER_SCALE * bu
        ln2g, ln2b = jnp.ones(H), jnp.zeros(H)
        vec.append(jnp.stack([vrow(b_qkv), vrow(b_o), vrow(ln1g), vrow(ln1b),
                              vrow(b_fi), vrow(b_fo), vrow(ln2g), vrow(ln2b)]))

    wc_row = dense((H, NUM_CLASSES)).reshape(H)
    bc_row = jnp.zeros(H, jnp.float32)                 # bias scalar lives in lane 0
    head = jnp.stack([jnp.ones(H, jnp.float32), jnp.zeros(H, jnp.float32),
                      wc_row, bc_row])                  # [4, H]

    return {
        "word_emb": dense((VOCAB, H)),
        "pos_emb": dense((MAX_POS, H)),
        "type_emb": dense((TYPE_VOCAB, H)),
        "head": head,
        "w_qkv": jnp.stack(w_qkv),   # [L, H, 3H]
        "w_o": jnp.stack(w_o),       # [L, H, H]
        "w_fi": jnp.stack(w_fi),     # [L, H, FUSED]
        "w_fo": jnp.stack(w_fo),     # [L, FUSED, H]
        "vec": jnp.stack(vec),       # [L, 8, 3H]
    }


# ---- full forward: embedding gathers in XLA, everything else fused in Pallas -
def adaptformer_forward(params, input_ids, attention_mask, labels):
    token_type_ids = jnp.zeros_like(input_ids)
    # RoBERTa position ids: cumsum over non-pad tokens + padding_idx
    not_pad = (input_ids != PAD_ID).astype(jnp.int32)
    position_ids = jnp.cumsum(not_pad, axis=1) * not_pad + PAD_ID

    emb = (params["word_emb"][input_ids]
           + params["pos_emb"][position_ids]
           + params["type_emb"][token_type_ids])
    emb_flat = emb.reshape(BS, H).astype(jnp.float32)

    # per-batch additive key bias + label packed into one lane-padded slab
    key_bias = (1.0 - attention_mask.astype(jnp.float32)) * -10000.0      # [B, S]
    misc = jnp.zeros((B, 1, OUT_W), jnp.float32)
    misc = misc.at[:, 0, 0:S].set(key_bias)
    misc = misc.at[:, 0, S].set(labels.astype(jnp.float32))

    inputs = (emb_flat, misc, params["head"],
              params["w_qkv"], params["w_o"], params["w_fi"], params["w_fo"],
              params["vec"])

    out = pl.pallas_call(
        fused_forward_kernel,
        out_shape=jax.ShapeDtypeStruct((B, 1, OUT_W), jnp.float32),
        grid=(B,),
        in_specs=[
            pl.BlockSpec((S, H), lambda b: (b, 0)),                  # emb (per batch)
            pl.BlockSpec((1, 1, OUT_W), lambda b: (b, 0, 0)),        # misc (per batch)
            pl.BlockSpec(params["head"].shape, lambda b: (0, 0)),    # head slab
            pl.BlockSpec(params["w_qkv"].shape, lambda b: (0, 0, 0)),
            pl.BlockSpec(params["w_o"].shape, lambda b: (0, 0, 0)),
            pl.BlockSpec(params["w_fi"].shape, lambda b: (0, 0, 0)),
            pl.BlockSpec(params["w_fo"].shape, lambda b: (0, 0, 0)),
            pl.BlockSpec(params["vec"].shape, lambda b: (0, 0, 0)),
        ],
        out_specs=pl.BlockSpec((1, 1, OUT_W), lambda b: (b, 0, 0)),
        compiler_params=pltpu.CompilerParams(
            dimension_semantics=("parallel",)),
    )(*inputs)

    outputs = out[:, 0, 0]                      # [B] scaled sigmoid scores
    loss = jnp.mean(out[:, 0, 1])               # mean of per-batch squared errors
    return loss, outputs


if __name__ == "__main__":
    key = jax.random.PRNGKey(0)
    pkey, ikey, lkey = jax.random.split(key, 3)

    params = init_params(pkey)
    # draw ids from [2, VOCAB) so no synthetic token collides with PAD_ID and
    # position ids stay consistent with the all-ones attention mask.
    input_ids = jax.random.randint(ikey, (B, S), 2, VOCAB, dtype=jnp.int32)
    attention_mask = jnp.ones((B, S), dtype=jnp.float32)
    labels = jax.random.uniform(lkey, (B,), minval=0.0, maxval=SCORE_RANGE,
                                dtype=jnp.float32)

    loss, outputs = adaptformer_forward(params, input_ids, attention_mask, labels)
    jax.block_until_ready((loss, outputs))
    assert outputs.shape == (B,) and loss.shape == ()
    assert bool(jnp.isfinite(loss)) and bool(jnp.all(jnp.isfinite(outputs)))
    print("KERNEL_OK")
</pallas_src>

<mosaic_0001>
module attributes {stable_mosaic.version = 11 : i64} {
  func.func @fused_forward_kernel(%arg0: i32, %arg1: memref<8x32xf32, #tpu.memory_space<vmem>>, %arg2: memref<1x1x128xf32, #tpu.memory_space<vmem>>, %arg3: memref<4x32xf32, #tpu.memory_space<vmem>>, %arg4: memref<2x32x96xf32, #tpu.memory_space<vmem>>, %arg5: memref<2x32x32xf32, #tpu.memory_space<vmem>>, %arg6: memref<2x32x72xf32, #tpu.memory_space<vmem>>, %arg7: memref<2x72x32xf32, #tpu.memory_space<vmem>>, %arg8: memref<2x8x96xf32, #tpu.memory_space<vmem>>, %arg9: memref<1x1x128xf32, #tpu.memory_space<vmem>>) attributes {dimension_semantics = [#tpu.dimension_semantics<parallel>], iteration_bounds = array<i64: 2>, scalar_prefetch = 0 : i64, scratch_operands = 0 : i64, tpu.core_type = #tpu.core_type<tc>, window_params = [{transform_indices = @transform_0, window_bounds = array<i64: 8, 32>}, {transform_indices = @transform_1, window_bounds = array<i64: 1, 1, 128>}, {pipeline_mode = #tpu.pipeline_mode<synchronous>, transform_indices = @transform_2, window_bounds = array<i64: 4, 32>}, {pipeline_mode = #tpu.pipeline_mode<synchronous>, transform_indices = @transform_3, window_bounds = array<i64: 2, 32, 96>}, {pipeline_mode = #tpu.pipeline_mode<synchronous>, transform_indices = @transform_4, window_bounds = array<i64: 2, 32, 32>}, {pipeline_mode = #tpu.pipeline_mode<synchronous>, transform_indices = @transform_5, window_bounds = array<i64: 2, 32, 72>}, {pipeline_mode = #tpu.pipeline_mode<synchronous>, transform_indices = @transform_6, window_bounds = array<i64: 2, 72, 32>}, {pipeline_mode = #tpu.pipeline_mode<synchronous>, transform_indices = @transform_7, window_bounds = array<i64: 2, 8, 96>}, {transform_indices = @transform_8, window_bounds = array<i64: 1, 1, 128>}]} {
    %c0 = arith.constant 0 : index
    %c0_0 = arith.constant 0 : index
    %0 = vector.load %arg3[%c0, %c0_0] : memref<4x32xf32, #tpu.memory_space<vmem>>, vector<4x32xf32>
    %c0_1 = arith.constant 0 : index
    %c0_2 = arith.constant 0 : index
    %c0_3 = arith.constant 0 : index
    %1 = vector.load %arg2[%c0_1, %c0_2, %c0_3] : memref<1x1x128xf32, #tpu.memory_space<vmem>>, vector<1x1x128xf32>
    %2 = vector.shape_cast %1 : vector<1x1x128xf32> to vector<1x128xf32>
    %3 = vector.extract_strided_slice %2 {offsets = [0, 0], sizes = [1, 8], strides = [1, 1]} : vector<1x128xf32> to vector<1x8xf32>
    %4 = vector.extract_strided_slice %2 {offsets = [0, 8], sizes = [1, 1], strides = [1, 1]} : vector<1x128xf32> to vector<1x1xf32>
    %c0_4 = arith.constant 0 : index
    %c0_5 = arith.constant 0 : index
    %5 = vector.load %arg1[%c0_4, %c0_5] : memref<8x32xf32, #tpu.memory_space<vmem>>, vector<8x32xf32>
    %6 = vector.extract_strided_slice %0 {offsets = [0, 0], sizes = [1, 32], strides = [1, 1]} : vector<4x32xf32> to vector<1x32xf32>
    %7 = vector.extract_strided_slice %0 {offsets = [1, 0], sizes = [1, 32], strides = [1, 1]} : vector<4x32xf32> to vector<1x32xf32>
    %cst = arith.constant dense<0.000000e+00> : vector<8xf32>
    %8 = vector.multi_reduction <add>, %5, %cst [1] : vector<8x32xf32> to vector<8xf32>
    %9 = vector.shape_cast %8 : vector<8xf32> to vector<8x1xf32>
    %cst_6 = arith.constant 3.200000e+01 : f32
    %10 = vector.broadcast %cst_6 : f32 to vector<8x1xf32>
    %11 = arith.divf %9, %10 : vector<8x1xf32>
    %12 = vector.broadcast %11 : vector<8x1xf32> to vector<8x32xf32>
    %13 = arith.subf %5, %12 : vector<8x32xf32>
    %14 = arith.mulf %13, %13 : vector<8x32xf32>
    %cst_7 = arith.constant dense<0.000000e+00> : vector<8xf32>
    %15 = vector.multi_reduction <add>, %14, %cst_7 [1] : vector<8x32xf32> to vector<8xf32>
    %16 = vector.shape_cast %15 : vector<8xf32> to vector<8x1xf32>
    %cst_8 = arith.constant 3.200000e+01 : f32
    %17 = vector.broadcast %cst_8 : f32 to vector<8x1xf32>
    %18 = arith.divf %16, %17 : vector<8x1xf32>
    %19 = vector.broadcast %11 : vector<8x1xf32> to vector<8x32xf32>
    %20 = arith.subf %5, %19 : vector<8x32xf32>
    %cst_9 = arith.constant 9.99999996E-13 : f32
    %21 = vector.broadcast %cst_9 : f32 to vector<8x1xf32>
    %22 = arith.addf %18, %21 : vector<8x1xf32>
    %23 = math.rsqrt %22 : vector<8x1xf32>
    %24 = vector.broadcast %23 : vector<8x1xf32> to vector<8x32xf32>
    %25 = arith.mulf %20, %24 : vector<8x32xf32>
    %26 = vector.broadcast %6 : vector<1x32xf32> to vector<8x32xf32>
    %27 = arith.mulf %25, %26 : vector<8x32xf32>
    %28 = vector.broadcast %7 : vector<1x32xf32> to vector<8x32xf32>
    %29 = arith.addf %27, %28 : vector<8x32xf32>
    %c0_10 = arith.constant 0 : index
    %c0_11 = arith.constant 0 : index
    %c0_12 = arith.constant 0 : index
    %30 = vector.load %arg8[%c0_10, %c0_11, %c0_12] : memref<2x8x96xf32, #tpu.memory_space<vmem>>, vector<1x8x96xf32>
    %31 = vector.shape_cast %30 : vector<1x8x96xf32> to vector<8x96xf32>
    %32 = vector.extract_strided_slice %31 {offsets = [0, 0], sizes = [1, 96], strides = [1, 1]} : vector<8x96xf32> to vector<1x96xf32>
    %33 = vector.extract_strided_slice %31 {offsets = [1, 0], sizes = [1, 32], strides = [1, 1]} : vector<8x96xf32> to vector<1x32xf32>
    %34 = vector.extract_strided_slice %31 {offsets = [2, 0], sizes = [1, 32], strides = [1, 1]} : vector<8x96xf32> to vector<1x32xf32>
    %35 = vector.extract_strided_slice %31 {offsets = [3, 0], sizes = [1, 32], strides = [1, 1]} : vector<8x96xf32> to vector<1x32xf32>
    %36 = vector.extract_strided_slice %31 {offsets = [4, 0], sizes = [1, 72], strides = [1, 1]} : vector<8x96xf32> to vector<1x72xf32>
    %37 = vector.extract_strided_slice %31 {offsets = [5, 0], sizes = [1, 32], strides = [1, 1]} : vector<8x96xf32> to vector<1x32xf32>
    %38 = vector.extract_strided_slice %31 {offsets = [6, 0], sizes = [1, 32], strides = [1, 1]} : vector<8x96xf32> to vector<1x32xf32>
    %39 = vector.extract_strided_slice %31 {offsets = [7, 0], sizes = [1, 32], strides = [1, 1]} : vector<8x96xf32> to vector<1x32xf32>
    %c0_13 = arith.constant 0 : index
    %c0_14 = arith.constant 0 : index
    %c0_15 = arith.constant 0 : index
    %40 = vector.load %arg4[%c0_13, %c0_14, %c0_15] : memref<2x32x96xf32, #tpu.memory_space<vmem>>, vector<1x32x96xf32>
    %41 = vector.shape_cast %40 : vector<1x32x96xf32> to vector<32x96xf32>
    %cst_16 = arith.constant dense<0.000000e+00> : vector<8x96xf32>
    %42 = tpu.matmul %29, %41, %cst_16 {dimension_numbers = #tpu.dot_dimension_numbers<[1], [0], [0], [1], [0, 0, 1, 1], [], []>} : vector<8x32xf32>, vector<32x96xf32>, vector<8x96xf32> -> vector<8x96xf32>
    %43 = vector.broadcast %32 : vector<1x96xf32> to vector<8x96xf32>
    %44 = arith.addf %42, %43 : vector<8x96xf32>
    %45 = vector.extract_strided_slice %44 {offsets = [0, 0], sizes = [8, 8], strides = [1, 1]} : vector<8x96xf32> to vector<8x8xf32>
    %46 = vector.extract_strided_slice %44 {offsets = [0, 8], sizes = [8, 8], strides = [1, 1]} : vector<8x96xf32> to vector<8x8xf32>
    %47 = vector.extract_strided_slice %44 {offsets = [0, 16], sizes = [8, 8], strides = [1, 1]} : vector<8x96xf32> to vector<8x8xf32>
    %48 = vector.extract_strided_slice %44 {offsets = [0, 24], sizes = [8, 8], strides = [1, 1]} : vector<8x96xf32> to vector<8x8xf32>
    %49 = vector.shape_cast %45 : vector<8x8xf32> to vector<1x8x8xf32>
    %50 = vector.shape_cast %46 : vector<8x8xf32> to vector<1x8x8xf32>
    %51 = vector.shape_cast %47 : vector<8x8xf32> to vector<1x8x8xf32>
    %52 = vector.shape_cast %48 : vector<8x8xf32> to vector<1x8x8xf32>
    %53 = tpu.concatenate %49, %50, %51, %52 in 0 : vector<1x8x8xf32>, vector<1x8x8xf32>, vector<1x8x8xf32>, vector<1x8x8xf32> -> vector<4x8x8xf32>
    %54 = vector.extract_strided_slice %44 {offsets = [0, 32], sizes = [8, 8], strides = [1, 1]} : vector<8x96xf32> to vector<8x8xf32>
    %55 = vector.extract_strided_slice %44 {offsets = [0, 40], sizes = [8, 8], strides = [1, 1]} : vector<8x96xf32> to vector<8x8xf32>
    %56 = vector.extract_strided_slice %44 {offsets = [0, 48], sizes = [8, 8], strides = [1, 1]} : vector<8x96xf32> to vector<8x8xf32>
    %57 = vector.extract_strided_slice %44 {offsets = [0, 56], sizes = [8, 8], strides = [1, 1]} : vector<8x96xf32> to vector<8x8xf32>
    %58 = vector.shape_cast %54 : vector<8x8xf32> to vector<1x8x8xf32>
    %59 = vector.shape_cast %55 : vector<8x8xf32> to vector<1x8x8xf32>
    %60 = vector.shape_cast %56 : vector<8x8xf32> to vector<1x8x8xf32>
    %61 = vector.shape_cast %57 : vector<8x8xf32> to vector<1x8x8xf32>
    %62 = tpu.concatenate %58, %59, %60, %61 in 0 : vector<1x8x8xf32>, vector<1x8x8xf32>, vector<1x8x8xf32>, vector<1x8x8xf32> -> vector<4x8x8xf32>
    %63 = vector.extract_strided_slice %44 {offsets = [0, 64], sizes = [8, 8], strides = [1, 1]} : vector<8x96xf32> to vector<8x8xf32>
    %64 = vector.extract_strided_slice %44 {offsets = [0, 72], sizes = [8, 8], strides = [1, 1]} : vector<8x96xf32> to vector<8x8xf32>
    %65 = vector.extract_strided_slice %44 {offsets = [0, 80], sizes = [8, 8], strides = [1, 1]} : vector<8x96xf32> to vector<8x8xf32>
    %66 = vector.extract_strided_slice %44 {offsets = [0, 88], sizes = [8, 8], strides = [1, 1]} : vector<8x96xf32> to vector<8x8xf32>
    %67 = vector.shape_cast %63 : vector<8x8xf32> to vector<1x8x8xf32>
    %68 = vector.shape_cast %64 : vector<8x8xf32> to vector<1x8x8xf32>
    %69 = vector.shape_cast %65 : vector<8x8xf32> to vector<1x8x8xf32>
    %70 = vector.shape_cast %66 : vector<8x8xf32> to vector<1x8x8xf32>
    %71 = tpu.concatenate %67, %68, %69, %70 in 0 : vector<1x8x8xf32>, vector<1x8x8xf32>, vector<1x8x8xf32>, vector<1x8x8xf32> -> vector<4x8x8xf32>
    "tpu.trace_start"() <{level = 10 : i32, message = "hqd,hkd->hqk"}> : () -> ()
    %cst_17 = arith.constant dense<0.000000e+00> : vector<4x8x8xf32>
    %72 = tpu.matmul %53, %62, %cst_17 {dimension_numbers = #tpu.dot_dimension_numbers<[2], [2], [1], [1], [0, 0, 0, 1, 1, 1], [0], [0]>} : vector<4x8x8xf32>, vector<4x8x8xf32>, vector<4x8x8xf32> -> vector<4x8x8xf32>
    "tpu.trace_stop"() : () -> ()
    %cst_18 = arith.constant 0.353553385 : f32
    %73 = vector.broadcast %cst_18 : f32 to vector<4x8x8xf32>
    %74 = arith.mulf %72, %73 : vector<4x8x8xf32>
    %75 = vector.shape_cast %3 : vector<1x8xf32> to vector<1x1x8xf32>
    %76 = vector.broadcast %75 : vector<1x1x8xf32> to vector<4x8x8xf32>
    %77 = arith.addf %74, %76 : vector<4x8x8xf32>
    %cst_19 = arith.constant dense<0xFF800000> : vector<4x8xf32>
    %78 = vector.multi_reduction <maximumf>, %77, %cst_19 [2] : vector<4x8x8xf32> to vector<4x8xf32>
    %79 = vector.shape_cast %78 : vector<4x8xf32> to vector<4x8x1xf32>
    %80 = vector.broadcast %79 : vector<4x8x1xf32> to vector<4x8x8xf32>
    %81 = arith.subf %77, %80 : vector<4x8x8xf32>
    %82 = math.exp %81 : vector<4x8x8xf32>
    %cst_20 = arith.constant dense<0.000000e+00> : vector<4x8xf32>
    %83 = vector.multi_reduction <add>, %82, %cst_20 [2] : vector<4x8x8xf32> to vector<4x8xf32>
    %84 = vector.shape_cast %83 : vector<4x8xf32> to vector<4x8x1xf32>
    %85 = vector.broadcast %84 : vector<4x8x1xf32> to vector<4x8x8xf32>
    %86 = arith.divf %82, %85 : vector<4x8x8xf32>
    "tpu.trace_start"() <{level = 10 : i32, message = "hqk,hkd->hqd"}> : () -> ()
    %cst_21 = arith.constant dense<0.000000e+00> : vector<4x8x8xf32>
    %87 = tpu.matmul %86, %71, %cst_21 {dimension_numbers = #tpu.dot_dimension_numbers<[2], [1], [1], [2], [0, 0, 0, 1, 1, 2], [0], [0]>} : vector<4x8x8xf32>, vector<4x8x8xf32>, vector<4x8x8xf32> -> vector<4x8x8xf32>
    "tpu.trace_stop"() : () -> ()
    %88 = vector.extract_strided_slice %87 {offsets = [0, 0, 0], sizes = [1, 8, 8], strides = [1, 1, 1]} : vector<4x8x8xf32> to vector<1x8x8xf32>
    %89 = vector.shape_cast %88 : vector<1x8x8xf32> to vector<8x8xf32>
    %90 = vector.extract_strided_slice %87 {offsets = [1, 0, 0], sizes = [1, 8, 8], strides = [1, 1, 1]} : vector<4x8x8xf32> to vector<1x8x8xf32>
    %91 = vector.shape_cast %90 : vector<1x8x8xf32> to vector<8x8xf32>
    %92 = vector.extract_strided_slice %87 {offsets = [2, 0, 0], sizes = [1, 8, 8], strides = [1, 1, 1]} : vector<4x8x8xf32> to vector<1x8x8xf32>
    %93 = vector.shape_cast %92 : vector<1x8x8xf32> to vector<8x8xf32>
    %94 = vector.extract_strided_slice %87 {offsets = [3, 0, 0], sizes = [1, 8, 8], strides = [1, 1, 1]} : vector<4x8x8xf32> to vector<1x8x8xf32>
    %95 = vector.shape_cast %94 : vector<1x8x8xf32> to vector<8x8xf32>
    %96 = tpu.concatenate %89, %91, %93, %95 in 1 : vector<8x8xf32>, vector<8x8xf32>, vector<8x8xf32>, vector<8x8xf32> -> vector<8x32xf32>
    %c0_22 = arith.constant 0 : index
    %c0_23 = arith.constant 0 : index
    %c0_24 = arith.constant 0 : index
    %97 = vector.load %arg5[%c0_22, %c0_23, %c0_24] : memref<2x32x32xf32, #tpu.memory_space<vmem>>, vector<1x32x32xf32>
    %98 = vector.shape_cast %97 : vector<1x32x32xf32> to vector<32x32xf32>
    %cst_25 = arith.constant dense<0.000000e+00> : vector<8x32xf32>
    %99 = tpu.matmul %96, %98, %cst_25 {dimension_numbers = #tpu.dot_dimension_numbers<[1], [0], [0], [1], [0, 0, 1, 1], [], []>} : vector<8x32xf32>, vector<32x32xf32>, vector<8x32xf32> -> vector<8x32xf32>
    %100 = vector.broadcast %33 : vector<1x32xf32> to vector<8x32xf32>
    %101 = arith.addf %99, %100 : vector<8x32xf32>
    %102 = arith.addf %101, %29 : vector<8x32xf32>
    %cst_26 = arith.constant dense<0.000000e+00> : vector<8xf32>
    %103 = vector.multi_reduction <add>, %102, %cst_26 [1] : vector<8x32xf32> to vector<8xf32>
    %104 = vector.shape_cast %103 : vector<8xf32> to vector<8x1xf32>
    %cst_27 = arith.constant 3.200000e+01 : f32
    %105 = vector.broadcast %cst_27 : f32 to vector<8x1xf32>
    %106 = arith.divf %104, %105 : vector<8x1xf32>
    %107 = vector.broadcast %106 : vector<8x1xf32> to vector<8x32xf32>
    %108 = arith.subf %102, %107 : vector<8x32xf32>
    %109 = arith.mulf %108, %108 : vector<8x32xf32>
    %cst_28 = arith.constant dense<0.000000e+00> : vector<8xf32>
    %110 = vector.multi_reduction <add>, %109, %cst_28 [1] : vector<8x32xf32> to vector<8xf32>
    %111 = vector.shape_cast %110 : vector<8xf32> to vector<8x1xf32>
    %cst_29 = arith.constant 3.200000e+01 : f32
    %112 = vector.broadcast %cst_29 : f32 to vector<8x1xf32>
    %113 = arith.divf %111, %112 : vector<8x1xf32>
    %114 = vector.broadcast %106 : vector<8x1xf32> to vector<8x32xf32>
    %115 = arith.subf %102, %114 : vector<8x32xf32>
    %cst_30 = arith.constant 9.99999996E-13 : f32
    %116 = vector.broadcast %cst_30 : f32 to vector<8x1xf32>
    %117 = arith.addf %113, %116 : vector<8x1xf32>
    %118 = math.rsqrt %117 : vector<8x1xf32>
    %119 = vector.broadcast %118 : vector<8x1xf32> to vector<8x32xf32>
    %120 = arith.mulf %115, %119 : vector<8x32xf32>
    %121 = vector.broadcast %34 : vector<1x32xf32> to vector<8x32xf32>
    %122 = arith.mulf %120, %121 : vector<8x32xf32>
    %123 = vector.broadcast %35 : vector<1x32xf32> to vector<8x32xf32>
    %124 = arith.addf %122, %123 : vector<8x32xf32>
    %c0_31 = arith.constant 0 : index
    %c0_32 = arith.constant 0 : index
    %c0_33 = arith.constant 0 : index
    %125 = vector.load %arg6[%c0_31, %c0_32, %c0_33] : memref<2x32x72xf32, #tpu.memory_space<vmem>>, vector<1x32x72xf32>
    %126 = vector.shape_cast %125 : vector<1x32x72xf32> to vector<32x72xf32>
    %cst_34 = arith.constant dense<0.000000e+00> : vector<8x72xf32>
    %127 = tpu.matmul %124, %126, %cst_34 {dimension_numbers = #tpu.dot_dimension_numbers<[1], [0], [0], [1], [0, 0, 1, 1], [], []>} : vector<8x32xf32>, vector<32x72xf32>, vector<8x72xf32> -> vector<8x72xf32>
    %128 = vector.broadcast %36 : vector<1x72xf32> to vector<8x72xf32>
    %129 = arith.addf %127, %128 : vector<8x72xf32>
    %130 = tpu.iota {dimensions = array<i32: 1>} : vector<8x72xi32>
    %c64_i32 = arith.constant 64 : i32
    %131 = vector.broadcast %c64_i32 : i32 to vector<8x72xi32>
    %132 = arith.cmpi slt, %130, %131 : vector<8x72xi32>
    %133 = arith.mulf %129, %129 : vector<8x72xf32>
    %134 = arith.mulf %129, %133 : vector<8x72xf32>
    %cst_35 = arith.constant 4.471500e-02 : f32
    %135 = vector.broadcast %cst_35 : f32 to vector<8x72xf32>
    %136 = arith.mulf %135, %134 : vector<8x72xf32>
    %137 = arith.addf %129, %136 : vector<8x72xf32>
    %cst_36 = arith.constant 0.797884583 : f32
    %138 = vector.broadcast %cst_36 : f32 to vector<8x72xf32>
    %139 = arith.mulf %138, %137 : vector<8x72xf32>
    %140 = math.tanh %139 : vector<8x72xf32>
    %cst_37 = arith.constant 1.000000e+00 : f32
    %141 = vector.broadcast %cst_37 : f32 to vector<8x72xf32>
    %142 = arith.addf %141, %140 : vector<8x72xf32>
    %cst_38 = arith.constant 5.000000e-01 : f32
    %143 = vector.broadcast %cst_38 : f32 to vector<8x72xf32>
    %144 = arith.mulf %143, %142 : vector<8x72xf32>
    %145 = arith.mulf %129, %144 : vector<8x72xf32>
    %cst_39 = arith.constant 0.000000e+00 : f32
    %146 = vector.broadcast %cst_39 : f32 to vector<8x72xf32>
    %147 = arith.maximumf %129, %146 : vector<8x72xf32>
    %148 = arith.select %132, %145, %147 : vector<8x72xi1>, vector<8x72xf32>
    %c0_40 = arith.constant 0 : index
    %c0_41 = arith.constant 0 : index
    %c0_42 = arith.constant 0 : index
    %149 = vector.load %arg7[%c0_40, %c0_41, %c0_42] : memref<2x72x32xf32, #tpu.memory_space<vmem>>, vector<1x72x32xf32>
    %150 = vector.shape_cast %149 : vector<1x72x32xf32> to vector<72x32xf32>
    %cst_43 = arith.constant dense<0.000000e+00> : vector<8x32xf32>
    %151 = tpu.matmul %148, %150, %cst_43 {dimension_numbers = #tpu.dot_dimension_numbers<[1], [0], [0], [1], [0, 0, 1, 1], [], []>} : vector<8x72xf32>, vector<72x32xf32>, vector<8x32xf32> -> vector<8x32xf32>
    %152 = vector.broadcast %37 : vector<1x32xf32> to vector<8x32xf32>
    %153 = arith.addf %151, %152 : vector<8x32xf32>
    %154 = arith.addf %153, %124 : vector<8x32xf32>
    %cst_44 = arith.constant dense<0.000000e+00> : vector<8xf32>
    %155 = vector.multi_reduction <add>, %154, %cst_44 [1] : vector<8x32xf32> to vector<8xf32>
    %156 = vector.shape_cast %155 : vector<8xf32> to vector<8x1xf32>
    %cst_45 = arith.constant 3.200000e+01 : f32
    %157 = vector.broadcast %cst_45 : f32 to vector<8x1xf32>
    %158 = arith.divf %156, %157 : vector<8x1xf32>
    %159 = vector.broadcast %158 : vector<8x1xf32> to vector<8x32xf32>
    %160 = arith.subf %154, %159 : vector<8x32xf32>
    %161 = arith.mulf %160, %160 : vector<8x32xf32>
    %cst_46 = arith.constant dense<0.000000e+00> : vector<8xf32>
    %162 = vector.multi_reduction <add>, %161, %cst_46 [1] : vector<8x32xf32> to vector<8xf32>
    %163 = vector.shape_cast %162 : vector<8xf32> to vector<8x1xf32>
    %cst_47 = arith.constant 3.200000e+01 : f32
    %164 = vector.broadcast %cst_47 : f32 to vector<8x1xf32>
    %165 = arith.divf %163, %164 : vector<8x1xf32>
    %166 = vector.broadcast %158 : vector<8x1xf32> to vector<8x32xf32>
    %167 = arith.subf %154, %166 : vector<8x32xf32>
    %cst_48 = arith.constant 9.99999996E-13 : f32
    %168 = vector.broadcast %cst_48 : f32 to vector<8x1xf32>
    %169 = arith.addf %165, %168 : vector<8x1xf32>
    %170 = math.rsqrt %169 : vector<8x1xf32>
    %171 = vector.broadcast %170 : vector<8x1xf32> to vector<8x32xf32>
    %172 = arith.mulf %167, %171 : vector<8x32xf32>
    %173 = vector.broadcast %38 : vector<1x32xf32> to vector<8x32xf32>
    %174 = arith.mulf %172, %173 : vector<8x32xf32>
    %175 = vector.broadcast %39 : vector<1x32xf32> to vector<8x32xf32>
    %176 = arith.addf %174, %175 : vector<8x32xf32>
    %c1 = arith.constant 1 : index
    %c0_49 = arith.constant 0 : index
    %c0_50 = arith.constant 0 : index
    %177 = vector.load %arg8[%c1, %c0_49, %c0_50] : memref<2x8x96xf32, #tpu.memory_space<vmem>>, vector<1x8x96xf32>
    %178 = vector.shape_cast %177 : vector<1x8x96xf32> to vector<8x96xf32>
    %179 = vector.extract_strided_slice %178 {offsets = [0, 0], sizes = [1, 96], strides = [1, 1]} : vector<8x96xf32> to vector<1x96xf32>
    %180 = vector.extract_strided_slice %178 {offsets = [1, 0], sizes = [1, 32], strides = [1, 1]} : vector<8x96xf32> to vector<1x32xf32>
    %181 = vector.extract_strided_slice %178 {offsets = [2, 0], sizes = [1, 32], strides = [1, 1]} : vector<8x96xf32> to vector<1x32xf32>
    %182 = vector.extract_strided_slice %178 {offsets = [3, 0], sizes = [1, 32], strides = [1, 1]} : vector<8x96xf32> to vector<1x32xf32>
    %183 = vector.extract_strided_slice %178 {offsets = [4, 0], sizes = [1, 72], strides = [1, 1]} : vector<8x96xf32> to vector<1x72xf32>
    %184 = vector.extract_strided_slice %178 {offsets = [5, 0], sizes = [1, 32], strides = [1, 1]} : vector<8x96xf32> to vector<1x32xf32>
    %185 = vector.extract_strided_slice %178 {offsets = [6, 0], sizes = [1, 32], strides = [1, 1]} : vector<8x96xf32> to vector<1x32xf32>
    %186 = vector.extract_strided_slice %178 {offsets = [7, 0], sizes = [1, 32], strides = [1, 1]} : vector<8x96xf32> to vector<1x32xf32>
    %c1_51 = arith.constant 1 : index
    %c0_52 = arith.constant 0 : index
    %c0_53 = arith.constant 0 : index
    %187 = vector.load %arg4[%c1_51, %c0_52, %c0_53] : memref<2x32x96xf32, #tpu.memory_space<vmem>>, vector<1x32x96xf32>
    %188 = vector.shape_cast %187 : vector<1x32x96xf32> to vector<32x96xf32>
    %cst_54 = arith.constant dense<0.000000e+00> : vector<8x96xf32>
    %189 = tpu.matmul %176, %188, %cst_54 {dimension_numbers = #tpu.dot_dimension_numbers<[1], [0], [0], [1], [0, 0, 1, 1], [], []>} : vector<8x32xf32>, vector<32x96xf32>, vector<8x96xf32> -> vector<8x96xf32>
    %190 = vector.broadcast %179 : vector<1x96xf32> to vector<8x96xf32>
    %191 = arith.addf %189, %190 : vector<8x96xf32>
    %192 = vector.extract_strided_slice %191 {offsets = [0, 0], sizes = [8, 8], strides = [1, 1]} : vector<8x96xf32> to vector<8x8xf32>
    %193 = vector.extract_strided_slice %191 {offsets = [0, 8], sizes = [8, 8], strides = [1, 1]} : vector<8x96xf32> to vector<8x8xf32>
    %194 = vector.extract_strided_slice %191 {offsets = [0, 16], sizes = [8, 8], strides = [1, 1]} : vector<8x96xf32> to vector<8x8xf32>
    %195 = vector.extract_strided_slice %191 {offsets = [0, 24], sizes = [8, 8], strides = [1, 1]} : vector<8x96xf32> to vector<8x8xf32>
    %196 = vector.shape_cast %192 : vector<8x8xf32> to vector<1x8x8xf32>
    %197 = vector.shape_cast %193 : vector<8x8xf32> to vector<1x8x8xf32>
    %198 = vector.shape_cast %194 : vector<8x8xf32> to vector<1x8x8xf32>
    %199 = vector.shape_cast %195 : vector<8x8xf32> to vector<1x8x8xf32>
    %200 = tpu.concatenate %196, %197, %198, %199 in 0 : vector<1x8x8xf32>, vector<1x8x8xf32>, vector<1x8x8xf32>, vector<1x8x8xf32> -> vector<4x8x8xf32>
    %201 = vector.extract_strided_slice %191 {offsets = [0, 32], sizes = [8, 8], strides = [1, 1]} : vector<8x96xf32> to vector<8x8xf32>
    %202 = vector.extract_strided_slice %191 {offsets = [0, 40], sizes = [8, 8], strides = [1, 1]} : vector<8x96xf32> to vector<8x8xf32>
    %203 = vector.extract_strided_slice %191 {offsets = [0, 48], sizes = [8, 8], strides = [1, 1]} : vector<8x96xf32> to vector<8x8xf32>
    %204 = vector.extract_strided_slice %191 {offsets = [0, 56], sizes = [8, 8], strides = [1, 1]} : vector<8x96xf32> to vector<8x8xf32>
    %205 = vector.shape_cast %201 : vector<8x8xf32> to vector<1x8x8xf32>
    %206 = vector.shape_cast %202 : vector<8x8xf32> to vector<1x8x8xf32>
    %207 = vector.shape_cast %203 : vector<8x8xf32> to vector<1x8x8xf32>
    %208 = vector.shape_cast %204 : vector<8x8xf32> to vector<1x8x8xf32>
    %209 = tpu.concatenate %205, %206, %207, %208 in 0 : vector<1x8x8xf32>, vector<1x8x8xf32>, vector<1x8x8xf32>, vector<1x8x8xf32> -> vector<4x8x8xf32>
    %210 = vector.extract_strided_slice %191 {offsets = [0, 64], sizes = [8, 8], strides = [1, 1]} : vector<8x96xf32> to vector<8x8xf32>
    %211 = vector.extract_strided_slice %191 {offsets = [0, 72], sizes = [8, 8], strides = [1, 1]} : vector<8x96xf32> to vector<8x8xf32>
    %212 = vector.extract_strided_slice %191 {offsets = [0, 80], sizes = [8, 8], strides = [1, 1]} : vector<8x96xf32> to vector<8x8xf32>
    %213 = vector.extract_strided_slice %191 {offsets = [0, 88], sizes = [8, 8], strides = [1, 1]} : vector<8x96xf32> to vector<8x8xf32>
    %214 = vector.shape_cast %210 : vector<8x8xf32> to vector<1x8x8xf32>
    %215 = vector.shape_cast %211 : vector<8x8xf32> to vector<1x8x8xf32>
    %216 = vector.shape_cast %212 : vector<8x8xf32> to vector<1x8x8xf32>
    %217 = vector.shape_cast %213 : vector<8x8xf32> to vector<1x8x8xf32>
    %218 = tpu.concatenate %214, %215, %216, %217 in 0 : vector<1x8x8xf32>, vector<1x8x8xf32>, vector<1x8x8xf32>, vector<1x8x8xf32> -> vector<4x8x8xf32>
    "tpu.trace_start"() <{level = 10 : i32, message = "hqd,hkd->hqk"}> : () -> ()
    %cst_55 = arith.constant dense<0.000000e+00> : vector<4x8x8xf32>
    %219 = tpu.matmul %200, %209, %cst_55 {dimension_numbers = #tpu.dot_dimension_numbers<[2], [2], [1], [1], [0, 0, 0, 1, 1, 1], [0], [0]>} : vector<4x8x8xf32>, vector<4x8x8xf32>, vector<4x8x8xf32> -> vector<4x8x8xf32>
    "tpu.trace_stop"() : () -> ()
    %cst_56 = arith.constant 0.353553385 : f32
    %220 = vector.broadcast %cst_56 : f32 to vector<4x8x8xf32>
    %221 = arith.mulf %219, %220 : vector<4x8x8xf32>
    %222 = vector.shape_cast %3 : vector<1x8xf32> to vector<1x1x8xf32>
    %223 = vector.broadcast %222 : vector<1x1x8xf32> to vector<4x8x8xf32>
    %224 = arith.addf %221, %223 : vector<4x8x8xf32>
    %cst_57 = arith.constant dense<0xFF800000> : vector<4x8xf32>
    %225 = vector.multi_reduction <maximumf>, %224, %cst_57 [2] : vector<4x8x8xf32> to vector<4x8xf32>
    %226 = vector.shape_cast %225 : vector<4x8xf32> to vector<4x8x1xf32>
    %227 = vector.broadcast %226 : vector<4x8x1xf32> to vector<4x8x8xf32>
    %228 = arith.subf %224, %227 : vector<4x8x8xf32>
    %229 = math.exp %228 : vector<4x8x8xf32>
    %cst_58 = arith.constant dense<0.000000e+00> : vector<4x8xf32>
    %230 = vector.multi_reduction <add>, %229, %cst_58 [2] : vector<4x8x8xf32> to vector<4x8xf32>
    %231 = vector.shape_cast %230 : vector<4x8xf32> to vector<4x8x1xf32>
    %232 = vector.broadcast %231 : vector<4x8x1xf32> to vector<4x8x8xf32>
    %233 = arith.divf %229, %232 : vector<4x8x8xf32>
    "tpu.trace_start"() <{level = 10 : i32, message = "hqk,hkd->hqd"}> : () -> ()
    %cst_59 = arith.constant dense<0.000000e+00> : vector<4x8x8xf32>
    %234 = tpu.matmul %233, %218, %cst_59 {dimension_numbers = #tpu.dot_dimension_numbers<[2], [1], [1], [2], [0, 0, 0, 1, 1, 2], [0], [0]>} : vector<4x8x8xf32>, vector<4x8x8xf32>, vector<4x8x8xf32> -> vector<4x8x8xf32>
    "tpu.trace_stop"() : () -> ()
    %235 = vector.extract_strided_slice %234 {offsets = [0, 0, 0], sizes = [1, 8, 8], strides = [1, 1, 1]} : vector<4x8x8xf32> to vector<1x8x8xf32>
    %236 = vector.shape_cast %235 : vector<1x8x8xf32> to vector<8x8xf32>
    %237 = vector.extract_strided_slice %234 {offsets = [1, 0, 0], sizes = [1, 8, 8], strides = [1, 1, 1]} : vector<4x8x8xf32> to vector<1x8x8xf32>
    %238 = vector.shape_cast %237 : vector<1x8x8xf32> to vector<8x8xf32>
    %239 = vector.extract_strided_slice %234 {offsets = [2, 0, 0], sizes = [1, 8, 8], strides = [1, 1, 1]} : vector<4x8x8xf32> to vector<1x8x8xf32>
    %240 = vector.shape_cast %239 : vector<1x8x8xf32> to vector<8x8xf32>
    %241 = vector.extract_strided_slice %234 {offsets = [3, 0, 0], sizes = [1, 8, 8], strides = [1, 1, 1]} : vector<4x8x8xf32> to vector<1x8x8xf32>
    %242 = vector.shape_cast %241 : vector<1x8x8xf32> to vector<8x8xf32>
    %243 = tpu.concatenate %236, %238, %240, %242 in 1 : vector<8x8xf32>, vector<8x8xf32>, vector<8x8xf32>, vector<8x8xf32> -> vector<8x32xf32>
    %c1_60 = arith.constant 1 : index
    %c0_61 = arith.constant 0 : index
    %c0_62 = arith.constant 0 : index
    %244 = vector.load %arg5[%c1_60, %c0_61, %c0_62] : memref<2x32x32xf32, #tpu.memory_space<vmem>>, vector<1x32x32xf32>
    %245 = vector.shape_cast %244 : vector<1x32x32xf32> to vector<32x32xf32>
    %cst_63 = arith.constant dense<0.000000e+00> : vector<8x32xf32>
    %246 = tpu.matmul %243, %245, %cst_63 {dimension_numbers = #tpu.dot_dimension_numbers<[1], [0], [0], [1], [0, 0, 1, 1], [], []>} : vector<8x32xf32>, vector<32x32xf32>, vector<8x32xf32> -> vector<8x32xf32>
    %247 = vector.broadcast %180 : vector<1x32xf32> to vector<8x32xf32>
    %248 = arith.addf %246, %247 : vector<8x32xf32>
    %249 = arith.addf %248, %176 : vector<8x32xf32>
    %cst_64 = arith.constant dense<0.000000e+00> : vector<8xf32>
    %250 = vector.multi_reduction <add>, %249, %cst_64 [1] : vector<8x32xf32> to vector<8xf32>
    %251 = vector.shape_cast %250 : vector<8xf32> to vector<8x1xf32>
    %cst_65 = arith.constant 3.200000e+01 : f32
    %252 = vector.broadcast %cst_65 : f32 to vector<8x1xf32>
    %253 = arith.divf %251, %252 : vector<8x1xf32>
    %254 = vector.broadcast %253 : vector<8x1xf32> to vector<8x32xf32>
    %255 = arith.subf %249, %254 : vector<8x32xf32>
    %256 = arith.mulf %255, %255 : vector<8x32xf32>
    %cst_66 = arith.constant dense<0.000000e+00> : vector<8xf32>
    %257 = vector.multi_reduction <add>, %256, %cst_66 [1] : vector<8x32xf32> to vector<8xf32>
    %258 = vector.shape_cast %257 : vector<8xf32> to vector<8x1xf32>
    %cst_67 = arith.constant 3.200000e+01 : f32
    %259 = vector.broadcast %cst_67 : f32 to vector<8x1xf32>
    %260 = arith.divf %258, %259 : vector<8x1xf32>
    %261 = vector.broadcast %253 : vector<8x1xf32> to vector<8x32xf32>
    %262 = arith.subf %249, %261 : vector<8x32xf32>
    %cst_68 = arith.constant 9.99999996E-13 : f32
    %263 = vector.broadcast %cst_68 : f32 to vector<8x1xf32>
    %264 = arith.addf %260, %263 : vector<8x1xf32>
    %265 = math.rsqrt %264 : vector<8x1xf32>
    %266 = vector.broadcast %265 : vector<8x1xf32> to vector<8x32xf32>
    %267 = arith.mulf %262, %266 : vector<8x32xf32>
    %268 = vector.broadcast %181 : vector<1x32xf32> to vector<8x32xf32>
    %269 = arith.mulf %267, %268 : vector<8x32xf32>
    %270 = vector.broadcast %182 : vector<1x32xf32> to vector<8x32xf32>
    %271 = arith.addf %269, %270 : vector<8x32xf32>
    %c1_69 = arith.constant 1 : index
    %c0_70 = arith.constant 0 : index
    %c0_71 = arith.constant 0 : index
    %272 = vector.load %arg6[%c1_69, %c0_70, %c0_71] : memref<2x32x72xf32, #tpu.memory_space<vmem>>, vector<1x32x72xf32>
    %273 = vector.shape_cast %272 : vector<1x32x72xf32> to vector<32x72xf32>
    %cst_72 = arith.constant dense<0.000000e+00> : vector<8x72xf32>
    %274 = tpu.matmul %271, %273, %cst_72 {dimension_numbers = #tpu.dot_dimension_numbers<[1], [0], [0], [1], [0, 0, 1, 1], [], []>} : vector<8x32xf32>, vector<32x72xf32>, vector<8x72xf32> -> vector<8x72xf32>
    %275 = vector.broadcast %183 : vector<1x72xf32> to vector<8x72xf32>
    %276 = arith.addf %274, %275 : vector<8x72xf32>
    %277 = tpu.iota {dimensions = array<i32: 1>} : vector<8x72xi32>
    %c64_i32_73 = arith.constant 64 : i32
    %278 = vector.broadcast %c64_i32_73 : i32 to vector<8x72xi32>
    %279 = arith.cmpi slt, %277, %278 : vector<8x72xi32>
    %280 = arith.mulf %276, %276 : vector<8x72xf32>
    %281 = arith.mulf %276, %280 : vector<8x72xf32>
    %cst_74 = arith.constant 4.471500e-02 : f32
    %282 = vector.broadcast %cst_74 : f32 to vector<8x72xf32>
    %283 = arith.mulf %282, %281 : vector<8x72xf32>
    %284 = arith.addf %276, %283 : vector<8x72xf32>
    %cst_75 = arith.constant 0.797884583 : f32
    %285 = vector.broadcast %cst_75 : f32 to vector<8x72xf32>
    %286 = arith.mulf %285, %284 : vector<8x72xf32>
    %287 = math.tanh %286 : vector<8x72xf32>
    %cst_76 = arith.constant 1.000000e+00 : f32
    %288 = vector.broadcast %cst_76 : f32 to vector<8x72xf32>
    %289 = arith.addf %288, %287 : vector<8x72xf32>
    %cst_77 = arith.constant 5.000000e-01 : f32
    %290 = vector.broadcast %cst_77 : f32 to vector<8x72xf32>
    %291 = arith.mulf %290, %289 : vector<8x72xf32>
    %292 = arith.mulf %276, %291 : vector<8x72xf32>
    %cst_78 = arith.constant 0.000000e+00 : f32
    %293 = vector.broadcast %cst_78 : f32 to vector<8x72xf32>
    %294 = arith.maximumf %276, %293 : vector<8x72xf32>
    %295 = arith.select %279, %292, %294 : vector<8x72xi1>, vector<8x72xf32>
    %c1_79 = arith.constant 1 : index
    %c0_80 = arith.constant 0 : index
    %c0_81 = arith.constant 0 : index
    %296 = vector.load %arg7[%c1_79, %c0_80, %c0_81] : memref<2x72x32xf32, #tpu.memory_space<vmem>>, vector<1x72x32xf32>
    %297 = vector.shape_cast %296 : vector<1x72x32xf32> to vector<72x32xf32>
    %cst_82 = arith.constant dense<0.000000e+00> : vector<8x32xf32>
    %298 = tpu.matmul %295, %297, %cst_82 {dimension_numbers = #tpu.dot_dimension_numbers<[1], [0], [0], [1], [0, 0, 1, 1], [], []>} : vector<8x72xf32>, vector<72x32xf32>, vector<8x32xf32> -> vector<8x32xf32>
    %299 = vector.broadcast %184 : vector<1x32xf32> to vector<8x32xf32>
    %300 = arith.addf %298, %299 : vector<8x32xf32>
    %301 = arith.addf %300, %271 : vector<8x32xf32>
    %cst_83 = arith.constant dense<0.000000e+00> : vector<8xf32>
    %302 = vector.multi_reduction <add>, %301, %cst_83 [1] : vector<8x32xf32> to vector<8xf32>
    %303 = vector.shape_cast %302 : vector<8xf32> to vector<8x1xf32>
    %cst_84 = arith.constant 3.200000e+01 : f32
    %304 = vector.broadcast %cst_84 : f32 to vector<8x1xf32>
    %305 = arith.divf %303, %304 : vector<8x1xf32>
    %306 = vector.broadcast %305 : vector<8x1xf32> to vector<8x32xf32>
    %307 = arith.subf %301, %306 : vector<8x32xf32>
    %308 = arith.mulf %307, %307 : vector<8x32xf32>
    %cst_85 = arith.constant dense<0.000000e+00> : vector<8xf32>
    %309 = vector.multi_reduction <add>, %308, %cst_85 [1] : vector<8x32xf32> to vector<8xf32>
    %310 = vector.shape_cast %309 : vector<8xf32> to vector<8x1xf32>
    %cst_86 = arith.constant 3.200000e+01 : f32
    %311 = vector.broadcast %cst_86 : f32 to vector<8x1xf32>
    %312 = arith.divf %310, %311 : vector<8x1xf32>
    %313 = vector.broadcast %305 : vector<8x1xf32> to vector<8x32xf32>
    %314 = arith.subf %301, %313 : vector<8x32xf32>
    %cst_87 = arith.constant 9.99999996E-13 : f32
    %315 = vector.broadcast %cst_87 : f32 to vector<8x1xf32>
    %316 = arith.addf %312, %315 : vector<8x1xf32>
    %317 = math.rsqrt %316 : vector<8x1xf32>
    %318 = vector.broadcast %317 : vector<8x1xf32> to vector<8x32xf32>
    %319 = arith.mulf %314, %318 : vector<8x32xf32>
    %320 = vector.broadcast %185 : vector<1x32xf32> to vector<8x32xf32>
    %321 = arith.mulf %319, %320 : vector<8x32xf32>
    %322 = vector.broadcast %186 : vector<1x32xf32> to vector<8x32xf32>
    %323 = arith.addf %321, %322 : vector<8x32xf32>
    %324 = vector.extract_strided_slice %323 {offsets = [0, 0], sizes = [1, 32], strides = [1, 1]} : vector<8x32xf32> to vector<1x32xf32>
    %325 = vector.extract_strided_slice %0 {offsets = [2, 0], sizes = [1, 32], strides = [1, 1]} : vector<4x32xf32> to vector<1x32xf32>
    %326 = arith.mulf %324, %325 : vector<1x32xf32>
    %cst_88 = arith.constant dense<0.000000e+00> : vector<1xf32>
    %327 = vector.multi_reduction <add>, %326, %cst_88 [1] : vector<1x32xf32> to vector<1xf32>
    %328 = vector.shape_cast %327 : vector<1xf32> to vector<1x1xf32>
    %329 = vector.extract_strided_slice %0 {offsets = [3, 0], sizes = [1, 1], strides = [1, 1]} : vector<4x32xf32> to vector<1x1xf32>
    %330 = arith.addf %328, %329 : vector<1x1xf32>
    %331 = arith.negf %330 : vector<1x1xf32>
    %332 = math.exp %331 : vector<1x1xf32>
    %cst_89 = arith.constant 1.000000e+00 : f32
    %333 = vector.broadcast %cst_89 : f32 to vector<1x1xf32>
    %334 = arith.addf %333, %332 : vector<1x1xf32>
    %335 = arith.divf %333, %334 : vector<1x1xf32>
    %cst_90 = arith.constant 5.000000e+00 : f32
    %336 = vector.broadcast %cst_90 : f32 to vector<1x1xf32>
    %337 = arith.mulf %336, %335 : vector<1x1xf32>
    %338 = arith.subf %337, %4 : vector<1x1xf32>
    %339 = arith.mulf %338, %338 : vector<1x1xf32>
    %340 = tpu.iota {dimensions = array<i32: 1>} : vector<1x128xi32>
    %c0_i32 = arith.constant 0 : i32
    %341 = vector.broadcast %c0_i32 : i32 to vector<1x128xi32>
    %342 = arith.cmpi eq, %340, %341 : vector<1x128xi32>
    %c1_i32 = arith.constant 1 : i32
    %343 = vector.broadcast %c1_i32 : i32 to vector<1x128xi32>
    %344 = arith.cmpi eq, %340, %343 : vector<1x128xi32>
    %cst_91 = arith.constant 0.000000e+00 : f32
    %345 = vector.shape_cast %339 : vector<1x1xf32> to vector<1x1xf32>
    %346 = vector.broadcast %345 : vector<1x1xf32> to vector<1x128xf32>
    %347 = vector.broadcast %cst_91 : f32 to vector<1x128xf32>
    %348 = arith.select %344, %346, %347 : vector<1x128xi1>, vector<1x128xf32>
    %349 = vector.shape_cast %337 : vector<1x1xf32> to vector<1x1xf32>
    %350 = vector.broadcast %349 : vector<1x1xf32> to vector<1x128xf32>
    %351 = arith.select %342, %350, %348 : vector<1x128xi1>, vector<1x128xf32>
    %c0_92 = arith.constant 0 : index
    %c0_93 = arith.constant 0 : index
    %c0_94 = arith.constant 0 : index
    %352 = vector.load %arg9[%c0_92, %c0_93, %c0_94] : memref<1x1x128xf32, #tpu.memory_space<vmem>>, vector<1x1x128xf32>
    %353 = vector.shape_cast %352 : vector<1x1x128xf32> to vector<1x128xf32>
    %354 = vector.shape_cast %351 : vector<1x128xf32> to vector<1x1x128xf32>
    tpu.vector_store %arg9[%c0_92, %c0_93, %c0_94], %354 {strides = array<i32>} : memref<1x1x128xf32, #tpu.memory_space<vmem>>, vector<1x1x128xf32>,
    return
  }
  func.func @transform_0(%arg0: i32) -> (i32, i32) {
    %c0_i32 = arith.constant 0 : i32
    %c0_i32_0 = arith.constant 0 : i32
    return %arg0, %c0_i32 : i32, i32
  }
  func.func @transform_1(%arg0: i32) -> (i32, i32, i32) {
    %c0_i32 = arith.constant 0 : i32
    %c0_i32_0 = arith.constant 0 : i32
    %c0_i32_1 = arith.constant 0 : i32
    return %arg0, %c0_i32, %c0_i32_0 : i32, i32, i32
  }
  func.func @transform_2(%arg0: i32) -> (i32, i32) {
    %c0_i32 = arith.constant 0 : i32
    %c0_i32_0 = arith.constant 0 : i32
    %c0_i32_1 = arith.constant 0 : i32
    return %c0_i32, %c0_i32_0 : i32, i32
  }
  func.func @transform_3(%arg0: i32) -> (i32, i32, i32) {
    %c0_i32 = arith.constant 0 : i32
    %c0_i32_0 = arith.constant 0 : i32
    %c0_i32_1 = arith.constant 0 : i32
    %c0_i32_2 = arith.constant 0 : i32
    return %c0_i32, %c0_i32_0, %c0_i32_1 : i32, i32, i32
  }
  func.func @transform_4(%arg0: i32) -> (i32, i32, i32) {
    %c0_i32 = arith.constant 0 : i32
    %c0_i32_0 = arith.constant 0 : i32
    %c0_i32_1 = arith.constant 0 : i32
    %c0_i32_2 = arith.constant 0 : i32
    return %c0_i32, %c0_i32_0, %c0_i32_1 : i32, i32, i32
  }
  func.func @transform_5(%arg0: i32) -> (i32, i32, i32) {
    %c0_i32 = arith.constant 0 : i32
    %c0_i32_0 = arith.constant 0 : i32
    %c0_i32_1 = arith.constant 0 : i32
    %c0_i32_2 = arith.constant 0 : i32
    return %c0_i32, %c0_i32_0, %c0_i32_1 : i32, i32, i32
  }
  func.func @transform_6(%arg0: i32) -> (i32, i32, i32) {
    %c0_i32 = arith.constant 0 : i32
    %c0_i32_0 = arith.constant 0 : i32
    %c0_i32_1 = arith.constant 0 : i32
    %c0_i32_2 = arith.constant 0 : i32
    return %c0_i32, %c0_i32_0, %c0_i32_1 : i32, i32, i32
  }
  func.func @transform_7(%arg0: i32) -> (i32, i32, i32) {
    %c0_i32 = arith.constant 0 : i32
    %c0_i32_0 = arith.constant 0 : i32
    %c0_i32_1 = arith.constant 0 : i32
    %c0_i32_2 = arith.constant 0 : i32
    return %c0_i32, %c0_i32_0, %c0_i32_1 : i32, i32, i32
  }
  func.func @transform_8(%arg0: i32) -> (i32, i32, i32) {
    %c0_i32 = arith.constant 0 : i32
    %c0_i32_0 = arith.constant 0 : i32
    %c0_i32_1 = arith.constant 0 : i32
    return %arg0, %c0_i32, %c0_i32_0 : i32, i32, i32
  }
}

</mosaic_0001>

<llo_original>
// kernel: tpu_custom_call.1
$region0: #{tpu_custom_call.1}
  #allocation0 [shape = 'u32[]', space=smem, size = 0x4, offset = 0x4, fixed_abs, tag = 'smem constant byte address 0x4 - core index']
  #allocation1 [shape = 'u32[72,128]{1,0:T(1,128)}', space=vmem, size = 0x9000, scoped, tag = 'internal scratch']
  %s0 = inlined_call_operand.vmem [shape: f32[16,32], index: 0, kind: input, shape index: {}]
  %s1 = inlined_call_operand.hbm [shape: f32[2,1,128], index: 1, kind: input, shape index: {}]
  %s2 = inlined_call_operand.hbm [shape: f32[4,32], index: 2, kind: input, shape index: {}]
  %s3 = inlined_call_operand.vmem [shape: f32[2,32,96], index: 3, kind: input, shape index: {}]
  %s4 = inlined_call_operand.vmem [shape: f32[2,32,32], index: 4, kind: input, shape index: {}]
  %s5 = inlined_call_operand.vmem [shape: f32[2,32,72], index: 5, kind: input, shape index: {}]
  %s6 = inlined_call_operand.vmem [shape: f32[2,72,32], index: 6, kind: input, shape index: {}]
  %s7 = inlined_call_operand.hbm [shape: f32[2,8,96], index: 7, kind: input, shape index: {}]
  %s8 = inlined_call_operand.hbm [shape: f32[2,1,128], index: 8, kind: output, shape index: {}]
  %s9 = sld [smem:[#allocation0]]
  $region77: #{tpu_custom_call.1} parent=0
    _
  %s11 = ssub.s32 1, %s9
  %s12 = scalar_select 0, %s11, %s9
  $region1: #{tpu_custom_call.1} parent=0
    #allocation2 [shape = 'u8[1024]{0}', space=vmem, size = 0x400, scoped, tag = 'input window, operand 1']
    #allocation3 [shape = 's32[2]{0}', space=sflag, size = 0x8, scoped, tag = 'scoped memory for tpu_custom_call.1']
    #allocation4 [shape = 's32[2]{0}', space=sflag, size = 0x8, scoped, tag = 'scoped memory for tpu_custom_call.1']
    #allocation5 [shape = 'u8[2048]{0}', space=vmem, size = 0x800, scoped, tag = 'input window, operand 2, single buffered']
    #allocation6 [shape = 's32[1]{0}', space=sflag, size = 0x4, scoped, tag = 'scoped memory for tpu_custom_call.1']
    #allocation7 [shape = 'u8[8192]{0}', space=vmem, size = 0x2000, scoped, tag = 'input window, operand 7, single buffered']
    #allocation8 [shape = 'u8[1024]{0}', space=vmem, size = 0x400, scoped, tag = 'output window, operand 0']
    %13 = vsyncpa [#allocation3], 0
    %s14 = scalar_lea.sflag [#allocation3], 1
    %15 = vsyncpa %s14, 0
    %16 = vsyncpa [#allocation6], 0
    %17 = vsyncpa [#allocation4], 0
    %s18 = scalar_lea.sflag [#allocation4], 1
    %19 = vsyncpa %s18, 0
    loop: start=0, step=1, limit=4
    $region2: #{tpu_custom_call.1} parent=1 // loop_pre_header
      _
    $region3: #{tpu_custom_call.1} parent=1 // loop_header
      %s21 = sphi 0, %s25
      %p22 = scmp.ge.s32.totalorder %s21, 4
      %s31 = sphi 0, %s33
      %s34 = sphi 0, %s31
      %s35 = sphi 0, %s34
      %s51 = sphi 0, %s35
      %s57 = sphi 0, %s59
      %s60 = sphi 0, %s57
      %s61 = sphi 0, %s60
      %s77 = sphi 0, %s61
      %s81 = sphi 0, %s81
      %s83 = sphi 0, %s81
      %s84 = sphi 0, %s83
      %s98 = sphi 0, %s84
      %s102 = sphi 0, %s102
      %s104 = sphi 0, %s102
      %s105 = sphi 0, %s104
      %s119 = sphi 0, %s105
      %s123 = sphi 0, %s123
      %s125 = sphi 0, %s123
      %s126 = sphi 0, %s125
      %s140 = sphi 0, %s126
      %s144 = sphi 0, %s144
      %s146 = sphi 0, %s144
      %s147 = sphi 0, %s146
      %s161 = sphi 0, %s147
      %s165 = sphi 0, %s165
      %s167 = sphi 0, %s165
      %s168 = sphi 0, %s167
      %s182 = sphi 0, %s168
      %s186 = sphi 0, %s186
      %s188 = sphi 0, %s186
      %s189 = sphi 0, %s188
      %s203 = sphi 0, %s189
      %s209 = sphi 0, %s211
      %s212 = sphi 0, %s209
      %s213 = sphi 0, %s212
      %s229 = sphi 0, %s213
    $region4: #{tpu_custom_call.1} parent=1 // loop_header_branch
      %24 = sbr.rel (%p22) target = $region8
    $region5: #{tpu_custom_call.1} parent=1 // loop_body
      %s26 = ssub.s32 %s21, 1
      %s27 = ssub.s32 %s21, 2
      %s28 = sadd.s32 %s21, 1
      %s29 = ssub.s32 %s21, %s28
      %p30 = scmp.eq.s32.totalorder %s29, 0
      %s32 = sadd.s32 %s31, 1
      %s33 = scalar_select %p30, %s31, %s32
      %p36 = pneg %p30
      %p37 = scmp.eq.s32.totalorder %s21, 1
      %p38 = por %p36, %p37
      %p39 = scmp.ne.s32.totalorder %s31, %s34
      %p40 = scmp.eq.s32.totalorder %s21, 0
      %p41 = por %p39, %p40
      %p42 = scmp.ne.s32.totalorder %s31, %s34
      %p43 = scmp.eq.s32.totalorder %s26, 1
      %p44 = por %p42, %p43
      %p45 = scmp.ne.s32.totalorder %s34, %s35
      %p46 = scmp.eq.s32.totalorder %s26, 0
      %p47 = por %p45, %p46
      %p48 = scmp.ne.s32.totalorder %s34, %s35
      %p49 = scmp.eq.s32.totalorder %s27, 1
      %p50 = por %p48, %p49
      %p52 = scmp.ne.s32.totalorder %s35, %s51
      %p53 = scmp.eq.s32.totalorder %s27, 0
      %p54 = por %p52, %p53
      %s55 = ssub.s32 %s21, %s28
      %p56 = scmp.eq.s32.totalorder %s55, 0
      %s58 = sadd.s32 %s57, 1
      %s59 = scalar_select %p56, %s57, %s58
      %p62 = pneg %p56
      %p63 = scmp.eq.s32.totalorder %s21, 1
      %p64 = por %p62, %p63
      %p65 = scmp.ne.s32.totalorder %s57, %s60
      %p66 = scmp.eq.s32.totalorder %s21, 0
      %p67 = por %p65, %p66
      %p68 = scmp.ne.s32.totalorder %s57, %s60
      %p69 = scmp.eq.s32.totalorder %s26, 1
      %p70 = por %p68, %p69
      %p71 = scmp.ne.s32.totalorder %s60, %s61
      %p72 = scmp.eq.s32.totalorder %s26, 0
      %p73 = por %p71, %p72
      %p74 = scmp.ne.s32.totalorder %s60, %s61
      %p75 = scmp.eq.s32.totalorder %s27, 1
      %p76 = por %p74, %p75
      %p78 = scmp.ne.s32.totalorder %s61, %s77
      %p79 = scmp.eq.s32.totalorder %s27, 0
      %p80 = por %p78, %p79
      %s82 = sadd.s32 %s81, 1
      %p85 = scmp.eq.s32.totalorder %s21, 1
      %p86 = scmp.ne.s32.totalorder %s81, %s83
      %p87 = scmp.eq.s32.totalorder %s21, 0
      %p88 = por %p86, %p87
      %p89 = scmp.ne.s32.totalorder %s81, %s83
      %p90 = scmp.eq.s32.totalorder %s26, 1
      %p91 = por %p89, %p90
      %p92 = scmp.ne.s32.totalorder %s83, %s84
      %p93 = scmp.eq.s32.totalorder %s26, 0
      %p94 = por %p92, %p93
      %p95 = scmp.ne.s32.totalorder %s83, %s84
      %p96 = scmp.eq.s32.totalorder %s27, 1
      %p97 = por %p95, %p96
      %p99 = scmp.ne.s32.totalorder %s84, %s98
      %p100 = scmp.eq.s32.totalorder %s27, 0
      %p101 = por %p99, %p100
      %s103 = sadd.s32 %s102, 1
      %p106 = scmp.eq.s32.totalorder %s21, 1
      %p107 = scmp.ne.s32.totalorder %s102, %s104
      %p108 = scmp.eq.s32.totalorder %s21, 0
      %p109 = por %p107, %p108
      %p110 = scmp.ne.s32.totalorder %s102, %s104
      %p111 = scmp.eq.s32.totalorder %s26, 1
      %p112 = por %p110, %p111
      %p113 = scmp.ne.s32.totalorder %s104, %s105
      %p114 = scmp.eq.s32.totalorder %s26, 0
      %p115 = por %p113, %p114
      %p116 = scmp.ne.s32.totalorder %s104, %s105
      %p117 = scmp.eq.s32.totalorder %s27, 1
      %p118 = por %p116, %p117
      %p120 = scmp.ne.s32.totalorder %s105, %s119
      %p121 = scmp.eq.s32.totalorder %s27, 0
      %p122 = por %p120, %p121
      %s124 = sadd.s32 %s123, 1
      %p127 = scmp.eq.s32.totalorder %s21, 1
      %p128 = scmp.ne.s32.totalorder %s123, %s125
      %p129 = scmp.eq.s32.totalorder %s21, 0
      %p130 = por %p128, %p129
      %p131 = scmp.ne.s32.totalorder %s123, %s125
      %p132 = scmp.eq.s32.totalorder %s26, 1
      %p133 = por %p131, %p132
      %p134 = scmp.ne.s32.totalorder %s125, %s126
      %p135 = scmp.eq.s32.totalorder %s26, 0
      %p136 = por %p134, %p135
      %p137 = scmp.ne.s32.totalorder %s125, %s126
      %p138 = scmp.eq.s32.totalorder %s27, 1
      %p139 = por %p137, %p138
      %p141 = scmp.ne.s32.totalorder %s126, %s140
      %p142 = scmp.eq.s32.totalorder %s27, 0
      %p143 = por %p141, %p142
      %s145 = sadd.s32 %s144, 1
      %p148 = scmp.eq.s32.totalorder %s21, 1
      %p149 = scmp.ne.s32.totalorder %s144, %s146
      %p150 = scmp.eq.s32.totalorder %s21, 0
      %p151 = por %p149, %p150
      %p152 = scmp.ne.s32.totalorder %s144, %s146
      %p153 = scmp.eq.s32.totalorder %s26, 1
      %p154 = por %p152, %p153
      %p155 = scmp.ne.s32.totalorder %s146, %s147
      %p156 = scmp.eq.s32.totalorder %s26, 0
      %p157 = por %p155, %p156
      %p158 = scmp.ne.s32.totalorder %s146, %s147
      %p159 = scmp.eq.s32.totalorder %s27, 1
      %p160 = por %p158, %p159
      %p162 = scmp.ne.s32.totalorder %s147, %s161
      %p163 = scmp.eq.s32.totalorder %s27, 0
      %p164 = por %p162, %p163
      %s166 = sadd.s32 %s165, 1
      %p169 = scmp.eq.s32.totalorder %s21, 1
      %p170 = scmp.ne.s32.totalorder %s165, %s167
      %p171 = scmp.eq.s32.totalorder %s21, 0
      %p172 = por %p170, %p171
      %p173 = scmp.ne.s32.totalorder %s165, %s167
      %p174 = scmp.eq.s32.totalorder %s26, 1
      %p175 = por %p173, %p174
      %p176 = scmp.ne.s32.totalorder %s167, %s168
      %p177 = scmp.eq.s32.totalorder %s26, 0
      %p178 = por %p176, %p177
      %p179 = scmp.ne.s32.totalorder %s167, %s168
      %p180 = scmp.eq.s32.totalorder %s27, 1
      %p181 = por %p179, %p180
      %p183 = scmp.ne.s32.totalorder %s168, %s182
      %p184 = scmp.eq.s32.totalorder %s27, 0
      %p185 = por %p183, %p184
      %s187 = sadd.s32 %s186, 1
      %p190 = scmp.eq.s32.totalorder %s21, 1
      %p191 = scmp.ne.s32.totalorder %s186, %s188
      %p192 = scmp.eq.s32.totalorder %s21, 0
      %p193 = por %p191, %p192
      %p194 = scmp.ne.s32.totalorder %s186, %s188
      %p195 = scmp.eq.s32.totalorder %s26, 1
      %p196 = por %p194, %p195
      %p197 = scmp.ne.s32.totalorder %s188, %s189
      %p198 = scmp.eq.s32.totalorder %s26, 0
      %p199 = por %p197, %p198
      %p200 = scmp.ne.s32.totalorder %s188, %s189
      %p201 = scmp.eq.s32.totalorder %s27, 1
      %p202 = por %p200, %p201
      %p204 = scmp.ne.s32.totalorder %s189, %s203
      %p205 = scmp.eq.s32.totalorder %s27, 0
      %p206 = por %p204, %p205
      %s207 = ssub.s32 %s21, %s28
      %p208 = scmp.eq.s32.totalorder %s207, 0
      %s210 = sadd.s32 %s209, 1
      %s211 = scalar_select %p208, %s209, %s210
      %p214 = pneg %p208
      %p215 = scmp.eq.s32.totalorder %s21, 1
      %p216 = por %p214, %p215
      %p217 = scmp.ne.s32.totalorder %s209, %s212
      %p218 = scmp.eq.s32.totalorder %s21, 0
      %p219 = por %p217, %p218
      %p220 = scmp.ne.s32.totalorder %s209, %s212
      %p221 = scmp.eq.s32.totalorder %s26, 1
      %p222 = por %p220, %p221
      %p223 = scmp.ne.s32.totalorder %s212, %s213
      %p224 = scmp.eq.s32.totalorder %s26, 0
      %p225 = por %p223, %p224
      %p226 = scmp.ne.s32.totalorder %s212, %s213
      %p227 = scmp.eq.s32.totalorder %s27, 1
      %p228 = por %p226, %p227
      %p230 = scmp.ne.s32.totalorder %s213, %s229
      %p231 = scmp.eq.s32.totalorder %s27, 0
      %p232 = por %p230, %p231
      %p233 = scmp.le.s32.totalorder 1, %s21
      %p234 = scmp.lt.s32.totalorder %s21, 3
      %p235 = pnand %p233, %p234
      %p236 = pneg %p235
      // Predicated region
      $region9: #{tpu_custom_call.1} parent=5 // pred_check
        _
      $region10: #{tpu_custom_call.1} parent=5 // pred_check_branch
        %238 = sbr.rel (%p235) target = $region12
      $region11: #{tpu_custom_call.1} parent=5 // pred_region
        %s239 = ssub.s32 %s21, 1
        // Predicated region
        $region13: #{tpu_custom_call.1} parent=11 // pred_check
          %p240 = pneg %p94
        $region14: #{tpu_custom_call.1} parent=11 // pred_check_branch
          %242 = sbr.rel (%p240) target = $region16
        $region15: #{tpu_custom_call.1} parent=11 // pred_region
          %244 = vsyncadd [#allocation6], 0
          %s246 = sshll.u32 %s2, 4
          %s247 = int_to_ptr.hbm [resolvable:$true] %s246
          %s248 = sshll.u32 [#allocation5], 4
          %s249 = int_to_ptr.vmem [resolvable:$true] %s248
          %251 = dma.hbm_to_vmem [thread:$0]  %s247, 64, %s249, [#allocation6]
        $region16: #{tpu_custom_call.1} parent=11 // pred_fallthru
          _
        // Predicated region
        $region17: #{tpu_custom_call.1} parent=11 // pred_check
          %p252 = pneg %p115
        $region18: #{tpu_custom_call.1} parent=11 // pred_check_branch
          %254 = sbr.rel (%p252) target = $region20
        $region19: #{tpu_custom_call.1} parent=11 // pred_region
          _
        $region20: #{tpu_custom_call.1} parent=11 // pred_fallthru
          _
        // Predicated region
        $region21: #{tpu_custom_call.1} parent=11 // pred_check
          %p255 = pneg %p136
        $region22: #{tpu_custom_call.1} parent=11 // pred_check_branch
          %257 = sbr.rel (%p255) target = $region24
        $region23: #{tpu_custom_call.1} parent=11 // pred_region
          _
        $region24: #{tpu_custom_call.1} parent=11 // pred_fallthru
          _
        // Predicated region
        $region25: #{tpu_custom_call.1} parent=11 // pred_check
          %p258 = pneg %p157
        $region26: #{tpu_custom_call.1} parent=11 // pred_check_branch
          %260 = sbr.rel (%p258) target = $region28
        $region27: #{tpu_custom_call.1} parent=11 // pred_region
          _
        $region28: #{tpu_custom_call.1} parent=11 // pred_fallthru
          _
        // Predicated region
        $region29: #{tpu_custom_call.1} parent=11 // pred_check
          %p261 = pneg %p178
        $region30: #{tpu_custom_call.1} parent=11 // pred_check_branch
          %263 = sbr.rel (%p261) target = $region32
        $region31: #{tpu_custom_call.1} parent=11 // pred_region
          _
        $region32: #{tpu_custom_call.1} parent=11 // pred_fallthru
          _
        // Predicated region
        $region33: #{tpu_custom_call.1} parent=11 // pred_check
          %p264 = pneg %p199
        $region34: #{tpu_custom_call.1} parent=11 // pred_check_branch
          %266 = sbr.rel (%p264) target = $region36
        $region35: #{tpu_custom_call.1} parent=11 // pred_region
          %268 = vsyncadd [#allocation6], 0
          %s269 = sshll.u32 %s7, 4
          %s270 = int_to_ptr.hbm [resolvable:$true] %s269
          %s271 = sshll.u32 [#allocation7], 4
          %s272 = int_to_ptr.vmem [resolvable:$true] %s271
          %277 = dma.hbm_to_vmem [thread:$0]  %s270, 256, %s272, [#allocation6], 128, 128, 8
        $region36: #{tpu_custom_call.1} parent=11 // pred_fallthru
          _
      $region12: #{tpu_custom_call.1} parent=5 // pred_fallthru
        _
      %p278 = scmp.lt.s32.totalorder %s21, 2
      // Predicated region
      $region37: #{tpu_custom_call.1} parent=5 // pred_check
        %p279 = pneg %p278
      $region38: #{tpu_custom_call.1} parent=5 // pred_check_branch
        %281 = sbr.rel (%p279) target = $region40
      $region39: #{tpu_custom_call.1} parent=5 // pred_region
        // Predicated region
        $region41: #{tpu_custom_call.1} parent=39 // pred_check
          %p282 = pneg %p41
        $region42: #{tpu_custom_call.1} parent=39 // pred_check_branch
          %284 = sbr.rel (%p282) target = $region44
        $region43: #{tpu_custom_call.1} parent=39 // pred_region
          %p285 = scmp.lt.s32.totalorder %s21, 1
          %s286 = scalar_select %p285, %s21, 1
          %s287 = smul.addr %s286, 8
          %s288 = scalar_lea.vmem %s0, %s287
        $region44: #{tpu_custom_call.1} parent=39 // pred_fallthru
          _
        // Predicated region
        $region45: #{tpu_custom_call.1} parent=39 // pred_check
          %p289 = pneg %p67
        $region46: #{tpu_custom_call.1} parent=39 // pred_check_branch
          %291 = sbr.rel (%p289) target = $region48
        $region47: #{tpu_custom_call.1} parent=39 // pred_region
          %s292 = sand.u32 %s57, 1
          %s293 = scalar_lea.sflag [#allocation3], %s292
          %s294 = sand.u32 %s57, 1
          %s295 = scalar_lea.vmem [#allocation2], %s294
          %297 = vsyncadd %s293, 0
          %s298 = scalar_lea.hbm %s1, %s21
          %s300 = sshll.u32 %s298, 4
          %s301 = int_to_ptr.hbm [resolvable:$true] %s300
          %s302 = sshll.u32 %s295, 4
          %s303 = int_to_ptr.vmem [resolvable:$true] %s302
          %305 = dma.hbm_to_vmem [thread:$0]  %s301, 16, %s303, %s293
        $region48: #{tpu_custom_call.1} parent=39 // pred_fallthru
          _
      $region40: #{tpu_custom_call.1} parent=5 // pred_fallthru
        _
      %p306 = scmp.le.s32.totalorder 1, %s21
      %p307 = scmp.lt.s32.totalorder %s21, 3
      %p308 = pnand %p306, %p307
      %p309 = pneg %p308
      // Predicated region
      $region49: #{tpu_custom_call.1} parent=5 // pred_check
        _
      $region50: #{tpu_custom_call.1} parent=5 // pred_check_branch
        %311 = sbr.rel (%p308) target = $region52
      $region51: #{tpu_custom_call.1} parent=5 // pred_region
        %s312 = ssub.s32 %s21, 1
        %s313 = sand.u32 %s60, 1
        %s314 = scalar_lea.sflag [#allocation3], %s313
        %s315 = sand.u32 %s60, 1
        %s316 = scalar_lea.vmem [#allocation2], %s315
        // Predicated region
        $region53: #{tpu_custom_call.1} parent=51 // pred_check
          %p317 = pneg %p73
        $region54: #{tpu_custom_call.1} parent=51 // pred_check_branch
          %319 = sbr.rel (%p317) target = $region56
        $region55: #{tpu_custom_call.1} parent=51 // pred_region
          %321 = dma.done %s314, 16
        $region56: #{tpu_custom_call.1} parent=51 // pred_fallthru
          _
        // Predicated region
        $region57: #{tpu_custom_call.1} parent=51 // pred_check
          %p322 = pneg %p94
        $region58: #{tpu_custom_call.1} parent=51 // pred_check_branch
          %324 = sbr.rel (%p322) target = $region60
        $region59: #{tpu_custom_call.1} parent=51 // pred_region
          %326 = dma.done [#allocation6], 64
        $region60: #{tpu_custom_call.1} parent=51 // pred_fallthru
          _
        // Predicated region
        $region61: #{tpu_custom_call.1} parent=51 // pred_check
          %p327 = pneg %p199
        $region62: #{tpu_custom_call.1} parent=51 // pred_check_branch
          %329 = sbr.rel (%p327) target = $region64
        $region63: #{tpu_custom_call.1} parent=51 // pred_region
          %331 = dma.done [#allocation6], 256
        $region64: #{tpu_custom_call.1} parent=51 // pred_fallthru
          _
        %p332 = scmp.lt.s32.totalorder %s26, 1
        %s333 = scalar_select %p332, %s26, 1
        %s334 = smul.addr %s333, 8
        %s335 = scalar_lea.vmem %s0, %s334
        %p336 = pneg %p47
        %p337 = pneg %p44
        %s338 = sand.u32 %s60, 1
        %s339 = scalar_lea.sflag [#allocation3], %s338
        %s340 = sand.u32 %s60, 1
        %s341 = scalar_lea.vmem [#allocation2], %s340
        %p342 = pneg %p73
        %p343 = pneg %p70
        %p344 = pneg %p94
        %p345 = pneg %p91
        %p346 = pneg %p115
        %p347 = pneg %p112
        %p348 = pneg %p136
        %p349 = pneg %p133
        %p350 = pneg %p157
        %p351 = pneg %p154
        %p352 = pneg %p178
        %p353 = pneg %p175
        %p354 = pneg %p199
        %p355 = pneg %p196
        %p356 = pneg %p225
        %p357 = pneg %p222
        %s358 = sand.u32 %s212, 1
        %s359 = scalar_lea.sflag [#allocation4], %s358
        %s360 = sand.u32 %s212, 1
        %s361 = scalar_lea.vmem [#allocation8], %s360
        %p362 = scmp.lt.s32.totalorder %s26, 1
        %s363 = scalar_select %p362, %s26, 1
        %s364 = smul.addr %s363, 8
        %s365 = scalar_lea.vmem %s0, %s364
        %v366 = vld [vmem:[#allocation5] sm:$0xf]
        %v367 = vld [vmem:[%s316] sm:$0x1]
        %v368 = vld [vmem:[%s365] sm:$0xff]
        %vm369 = vcmask 261120
        %v370 = vsel %vm369, %v368, 0.0
        %371 = vadd.xlane.f32.xlu0 %v370
        %v372 = vpop.xlane.xlu0 %371
        %v373 = vrcp.pop 32.0
        %v374 = vmul.f32 32.0, %v373
        %v375 = vsub.f32 1.0, %v374
        %v376 = vmul.f32 %v373, %v375
        %v377 = vadd.f32 %v373, %v376
        %vm378 = vweird.f32 %v373
        %v379 = vsel %vm378, %v373, %v377
        %v380 = vmul.f32 %v372, %v379
        %v381 = vsub.f32 %v368, %v380
        %v382 = vmul.f32 %v381, %v381
        %v383 = vsel %vm369, %v382, 0.0
        %384 = vadd.xlane.f32.xlu0 %v383
        %v385 = vpop.xlane.xlu0 %384
        %v386 = vmul.f32 %v385, %v379
        %v387 = vadd.f32 %v386, 1e-12
        %v388 = vrsqrt.pop %v387
        %v389 = vmul.f32 %v388, %v387
        %v390 = vmul.f32 %v389, %v388
        %v391 = vmul.f32 0.5, %v390
        %v392 = vsub.f32 1.5, %v391
        %v393 = vmul.f32 %v388, %v392
        %vm394 = vweird.f32 %v387
        %vm395 = vweird.f32 %v388
        %vm396 = vmor %vm394, %vm395
        %v397 = vsel %vm396, %v388, %v393
        %v398 = vmul.f32 %v381, %v397
        %v399 = vperm.slane %v366, 0
        %v400 = vmul.f32 %v398, %v399
        %v401 = vperm.slane %v366, 1
        %v402 = vadd.f32 %v400, %v401
        %v403 = vld [vmem:[#allocation7] sm:$0xff]
        %v404 = vld [vmem:[%s3] sm:$0xff]
        %v405 = vld [vmem:[%s3 + $0x8] sm:$0xff]
        %v406 = vld [vmem:[%s3 + $0x10] sm:$0xff]
        %v407 = vld [vmem:[%s3 + $0x18] sm:$0xff]
        %v408 = vperm.slane %v403, 0
        %v410 = vsel %vm369, %v402, 0
        %412 = vmatpush.msra.mxu0 0.0
        %413 = vmatpush.msra.mxu0 0.0
        %414 = vmatpush.msra.mxu0 0.0
        %415 = vmatpush.msra.mxu0 0.0
        %416 = vmatpush.msra.mxu0 0.0
        %417 = vmatpush.msra.mxu0 0.0
        %418 = vmatpush.msra.mxu0 0.0
        %419 = vmatpush.msra.mxu0 0.0
        %420 = vmatpush.msra.mxu0 0.0
        %421 = vmatpush.msra.mxu0 0.0
        %422 = vmatpush.msra.mxu0 0.0
        %423 = vmatpush.msra.mxu0 0.0
        %424 = vmatpush.msra.mxu0 %v407
        %425 = vmatpush.msra.mxu0 %v406
        %426 = vmatpush.msra.mxu0 %v405
        %427 = vmatpush.msra.mxu0 %v404
        %428 = vmatmul.f32.gmra.mxu0 %v410
        %v429 = vpop.f32.mrf.mxu0
        %v430 = vadd.f32 %v408, %v429
        %431 = vdwg.mxu0
        %433 = vrot.lane.b32.xlu0 %v430, 120
        %v434 = vpop.permute.xlu0 %433
        %435 = vrot.lane.b32.xlu0 %v430, 112
        %v436 = vpop.permute.xlu0 %435
        %437 = vrot.lane.b32.xlu0 %v430, 104
        %v438 = vpop.permute.xlu0 %437
        %439 = vrot.lane.b32.xlu0 %v430, 96
        %v440 = vpop.permute.xlu0 %439
        %vm441 = vcmask 64512
        %v442 = vsel %vm441, %v430, 0
        %v444 = vsel %vm441, %v440, 0
        %446 = vmatpush.xpose.msra.mxu0 0.0
        %447 = vmatpush.xpose.msra.mxu0 0.0
        %448 = vmatpush.xpose.msra.mxu0 0.0
        %449 = vmatpush.xpose.msra.mxu0 0.0
        %450 = vmatpush.xpose.msra.mxu0 0.0
        %451 = vmatpush.xpose.msra.mxu0 0.0
        %452 = vmatpush.xpose.msra.mxu0 0.0
        %453 = vmatpush.xpose.msra.mxu0 0.0
        %454 = vmatpush.xpose.msra.mxu0 0.0
        %455 = vmatpush.xpose.msra.mxu0 0.0
        %456 = vmatpush.xpose.msra.mxu0 0.0
        %457 = vmatpush.xpose.msra.mxu0 0.0
        %458 = vmatpush.xpose.msra.mxu0 0.0
        %459 = vmatpush.xpose.msra.mxu0 0.0
        %460 = vmatpush.xpose.msra.mxu0 0.0
        %461 = vmatpush.xpose.msra.mxu0 %v444
        %462 = vmatmul.f32.gmra.mxu0 %v442
        %v463 = vpop.f32.mrf.mxu0
        %v464 = vadd.f32 0.0, %v463
        %465 = vdwg.mxu0
        %466 = vrot.lane.b32.xlu0 %v434, 96
        %v467 = vpop.permute.xlu0 %466
        %v468 = vsel %vm441, %v434, 0
        %v470 = vsel %vm441, %v467, 0
        %472 = vmatpush.xpose.msra.mxu0 0.0
        %473 = vmatpush.xpose.msra.mxu0 0.0
        %474 = vmatpush.xpose.msra.mxu0 0.0
        %475 = vmatpush.xpose.msra.mxu0 0.0
        %476 = vmatpush.xpose.msra.mxu0 0.0
        %477 = vmatpush.xpose.msra.mxu0 0.0
        %478 = vmatpush.xpose.msra.mxu0 0.0
        %479 = vmatpush.xpose.msra.mxu0 0.0
        %480 = vmatpush.xpose.msra.mxu0 0.0
        %481 = vmatpush.xpose.msra.mxu0 0.0
        %482 = vmatpush.xpose.msra.mxu0 0.0
        %483 = vmatpush.xpose.msra.mxu0 0.0
        %484 = vmatpush.xpose.msra.mxu0 0.0
        %485 = vmatpush.xpose.msra.mxu0 0.0
        %486 = vmatpush.xpose.msra.mxu0 0.0
        %487 = vmatpush.xpose.msra.mxu0 %v470
        %488 = vmatmul.f32.gmra.mxu0 %v468
        %v489 = vpop.f32.mrf.mxu0
        %v490 = vadd.f32 0.0, %v489
        %491 = vdwg.mxu0
        %492 = vrot.lane.b32.xlu0 %v436, 96
        %v493 = vpop.permute.xlu0 %492
        %v494 = vsel %vm441, %v436, 0
        %v496 = vsel %vm441, %v493, 0
        %498 = vmatpush.xpose.msra.mxu0 0.0
        %499 = vmatpush.xpose.msra.mxu0 0.0
        %500 = vmatpush.xpose.msra.mxu0 0.0
        %501 = vmatpush.xpose.msra.mxu0 0.0
        %502 = vmatpush.xpose.msra.mxu0 0.0
        %503 = vmatpush.xpose.msra.mxu0 0.0
        %504 = vmatpush.xpose.msra.mxu0 0.0
        %505 = vmatpush.xpose.msra.mxu0 0.0
        %506 = vmatpush.xpose.msra.mxu0 0.0
        %507 = vmatpush.xpose.msra.mxu0 0.0
        %508 = vmatpush.xpose.msra.mxu0 0.0
        %509 = vmatpush.xpose.msra.mxu0 0.0
        %510 = vmatpush.xpose.msra.mxu0 0.0
        %511 = vmatpush.xpose.msra.mxu0 0.0
        %512 = vmatpush.xpose.msra.mxu0 0.0
        %513 = vmatpush.xpose.msra.mxu0 %v496
        %514 = vmatmul.f32.gmra.mxu0 %v494
        %v515 = vpop.f32.mrf.mxu0
        %v516 = vadd.f32 0.0, %v515
        %517 = vdwg.mxu0
        %518 = vrot.lane.b32.xlu0 %v438, 96
        %v519 = vpop.permute.xlu0 %518
        %v520 = vsel %vm441, %v438, 0
        %v522 = vsel %vm441, %v519, 0
        %524 = vmatpush.xpose.msra.mxu0 0.0
        %525 = vmatpush.xpose.msra.mxu0 0.0
        %526 = vmatpush.xpose.msra.mxu0 0.0
        %527 = vmatpush.xpose.msra.mxu0 0.0
        %528 = vmatpush.xpose.msra.mxu0 0.0
        %529 = vmatpush.xpose.msra.mxu0 0.0
        %530 = vmatpush.xpose.msra.mxu0 0.0
        %531 = vmatpush.xpose.msra.mxu0 0.0
        %532 = vmatpush.xpose.msra.mxu0 0.0
        %533 = vmatpush.xpose.msra.mxu0 0.0
        %534 = vmatpush.xpose.msra.mxu0 0.0
        %535 = vmatpush.xpose.msra.mxu0 0.0
        %536 = vmatpush.xpose.msra.mxu0 0.0
        %537 = vmatpush.xpose.msra.mxu0 0.0
        %538 = vmatpush.xpose.msra.mxu0 0.0
        %539 = vmatpush.xpose.msra.mxu0 %v522
        %540 = vmatmul.f32.gmra.mxu0 %v520
        %v541 = vpop.f32.mrf.mxu0
        %v542 = vadd.f32 0.0, %v541
        %543 = vdwg.mxu0
        %v544 = vmul.f32 %v464, 0.35355338
        %v545 = vmul.f32 %v490, 0.35355338
        %v546 = vmul.f32 %v516, 0.35355338
        %v547 = vmul.f32 %v542, 0.35355338
        %v549 = vperm.slane %v367, 0
        %v551 = vadd.f32 %v544, %v549
        %v552 = vadd.f32 %v545, %v549
        %v553 = vadd.f32 %v546, %v549
        %v554 = vadd.f32 %v547, %v549
        %v555 = vsel %vm441, %v551, -inf
        %556 = vmax.xlane.f32.xlu0 %v555
        %v557 = vpop.xlane.xlu0 %556
        %v558 = vsel %vm441, %v552, -inf
        %559 = vmax.xlane.f32.xlu0 %v558
        %v560 = vpop.xlane.xlu0 %559
        %v561 = vsel %vm441, %v553, -inf
        %562 = vmax.xlane.f32.xlu0 %v561
        %v563 = vpop.xlane.xlu0 %562
        %v564 = vsel %vm441, %v554, -inf
        %565 = vmax.xlane.f32.xlu0 %v564
        %v566 = vpop.xlane.xlu0 %565
        %v567 = vsub.f32 %v551, %v557
        %v568 = vsub.f32 %v552, %v560
        %v569 = vsub.f32 %v553, %v563
        %v570 = vsub.f32 %v554, %v566
        %v571 = vmul.f32 %v567, 1.442695
        %v572 = vpow.pop %v571
        %v573 = vmul.f32 %v568, 1.442695
        %v574 = vpow.pop %v573
        %v575 = vmul.f32 %v569, 1.442695
        %v576 = vpow.pop %v575
        %v577 = vmul.f32 %v570, 1.442695
        %v578 = vpow.pop %v577
        %v579 = vsel %vm441, %v572, 0.0
        %580 = vadd.xlane.f32.xlu0 %v579
        %v581 = vpop.xlane.xlu0 %580
        %v582 = vsel %vm441, %v574, 0.0
        %583 = vadd.xlane.f32.xlu0 %v582
        %v584 = vpop.xlane.xlu0 %583
        %v585 = vsel %vm441, %v576, 0.0
        %586 = vadd.xlane.f32.xlu0 %v585
        %v587 = vpop.xlane.xlu0 %586
        %v588 = vsel %vm441, %v578, 0.0
        %589 = vadd.xlane.f32.xlu0 %v588
        %v590 = vpop.xlane.xlu0 %589
        %v591 = vrcp.pop %v581
        %v592 = vmul.f32 %v581, %v591
        %v593 = vsub.f32 1.0, %v592
        %v594 = vmul.f32 %v591, %v593
        %v595 = vadd.f32 %v591, %v594
        %vm596 = vweird.f32 %v581
        %vm597 = vweird.f32 %v591
        %vm598 = vmor %vm596, %vm597
        %v599 = vsel %vm598, %v591, %v595
        %v600 = vand.u32 2147483647, %v581
        %vm601 = vcmp.eq.f32.partialorder %v600, 8.507059e+37
        %v602 = vand.u32 %v581, 2147483648
        %v603 = vor.u32 1.1754944e-38, %v602
        %v604 = vsel %vm601, %v603, %v599
        %v605 = vmul.f32 %v572, %v604
        %v606 = vrcp.pop %v584
        %v607 = vmul.f32 %v584, %v606
        %v608 = vsub.f32 1.0, %v607
        %v609 = vmul.f32 %v606, %v608
        %v610 = vadd.f32 %v606, %v609
        %vm611 = vweird.f32 %v584
        %vm612 = vweird.f32 %v606
        %vm613 = vmor %vm611, %vm612
        %v614 = vsel %vm613, %v606, %v610
        %v615 = vand.u32 2147483647, %v584
        %vm616 = vcmp.eq.f32.partialorder %v615, 8.507059e+37
        %v617 = vand.u32 %v584, 2147483648
        %v618 = vor.u32 1.1754944e-38, %v617
        %v619 = vsel %vm616, %v618, %v614
        %v620 = vmul.f32 %v574, %v619
        %v621 = vrcp.pop %v587
        %v622 = vmul.f32 %v587, %v621
        %v623 = vsub.f32 1.0, %v622
        %v624 = vmul.f32 %v621, %v623
        %v625 = vadd.f32 %v621, %v624
        %vm626 = vweird.f32 %v587
        %vm627 = vweird.f32 %v621
        %vm628 = vmor %vm626, %vm627
        %v629 = vsel %vm628, %v621, %v625
        %v630 = vand.u32 2147483647, %v587
        %vm631 = vcmp.eq.f32.partialorder %v630, 8.507059e+37
        %v632 = vand.u32 %v587, 2147483648
        %v633 = vor.u32 1.1754944e-38, %v632
        %v634 = vsel %vm631, %v633, %v629
        %v635 = vmul.f32 %v576, %v634
        %v636 = vrcp.pop %v590
        %v637 = vmul.f32 %v590, %v636
        %v638 = vsub.f32 1.0, %v637
        %v639 = vmul.f32 %v636, %v638
        %v640 = vadd.f32 %v636, %v639
        %vm641 = vweird.f32 %v590
        %vm642 = vweird.f32 %v636
        %vm643 = vmor %vm641, %vm642
        %v644 = vsel %vm643, %v636, %v640
        %v645 = vand.u32 2147483647, %v590
        %vm646 = vcmp.eq.f32.partialorder %v645, 8.507059e+37
        %v647 = vand.u32 %v590, 2147483648
        %v648 = vor.u32 1.1754944e-38, %v647
        %v649 = vsel %vm646, %v648, %v644
        %v650 = vmul.f32 %v578, %v649
        %651 = vrot.lane.b32.xlu0 %v430, 64
        %v652 = vpop.permute.xlu0 %651
        %v655 = vsel %vm441, %v605, 0
        %657 = vmatpush.msra.mxu0 0.0
        %658 = vmatpush.msra.mxu0 0.0
        %659 = vmatpush.msra.mxu0 0.0
        %660 = vmatpush.msra.mxu0 0.0
        %661 = vmatpush.msra.mxu0 0.0
        %662 = vmatpush.msra.mxu0 0.0
        %663 = vmatpush.msra.mxu0 0.0
        %664 = vmatpush.msra.mxu0 0.0
        %665 = vmatpush.msra.mxu0 0.0
        %666 = vmatpush.msra.mxu0 0.0
        %667 = vmatpush.msra.mxu0 0.0
        %668 = vmatpush.msra.mxu0 0.0
        %669 = vmatpush.msra.mxu0 0.0
        %670 = vmatpush.msra.mxu0 0.0
        %671 = vmatpush.msra.mxu0 0.0
        %672 = vmatpush.msra.mxu0 %v652
        %673 = vmatmul.f32.gmra.mxu0 %v655
        %v674 = vpop.f32.mrf.mxu0
        %v675 = vadd.f32 0.0, %v674
        %676 = vdwg.mxu0
        %677 = vrot.lane.b32.xlu0 %v434, 64
        %v678 = vpop.permute.xlu0 %677
        %v681 = vsel %vm441, %v620, 0
        %683 = vmatpush.msra.mxu0 0.0
        %684 = vmatpush.msra.mxu0 0.0
        %685 = vmatpush.msra.mxu0 0.0
        %686 = vmatpush.msra.mxu0 0.0
        %687 = vmatpush.msra.mxu0 0.0
        %688 = vmatpush.msra.mxu0 0.0
        %689 = vmatpush.msra.mxu0 0.0
        %690 = vmatpush.msra.mxu0 0.0
        %691 = vmatpush.msra.mxu0 0.0
        %692 = vmatpush.msra.mxu0 0.0
        %693 = vmatpush.msra.mxu0 0.0
        %694 = vmatpush.msra.mxu0 0.0
        %695 = vmatpush.msra.mxu0 0.0
        %696 = vmatpush.msra.mxu0 0.0
        %697 = vmatpush.msra.mxu0 0.0
        %698 = vmatpush.msra.mxu0 %v678
        %699 = vmatmul.f32.gmra.mxu0 %v681
        %v700 = vpop.f32.mrf.mxu0
        %v701 = vadd.f32 0.0, %v700
        %702 = vdwg.mxu0
        %703 = vrot.lane.b32.xlu0 %v436, 64
        %v704 = vpop.permute.xlu0 %703
        %v707 = vsel %vm441, %v635, 0
        %709 = vmatpush.msra.mxu0 0.0
        %710 = vmatpush.msra.mxu0 0.0
        %711 = vmatpush.msra.mxu0 0.0
        %712 = vmatpush.msra.mxu0 0.0
        %713 = vmatpush.msra.mxu0 0.0
        %714 = vmatpush.msra.mxu0 0.0
        %715 = vmatpush.msra.mxu0 0.0
        %716 = vmatpush.msra.mxu0 0.0
        %717 = vmatpush.msra.mxu0 0.0
        %718 = vmatpush.msra.mxu0 0.0
        %719 = vmatpush.msra.mxu0 0.0
        %720 = vmatpush.msra.mxu0 0.0
        %721 = vmatpush.msra.mxu0 0.0
        %722 = vmatpush.msra.mxu0 0.0
        %723 = vmatpush.msra.mxu0 0.0
        %724 = vmatpush.msra.mxu0 %v704
        %725 = vmatmul.f32.gmra.mxu0 %v707
        %v726 = vpop.f32.mrf.mxu0
        %v727 = vadd.f32 0.0, %v726
        %728 = vdwg.mxu0
        %729 = vrot.lane.b32.xlu0 %v438, 64
        %v730 = vpop.permute.xlu0 %729
        %v733 = vsel %vm441, %v650, 0
        %735 = vmatpush.msra.mxu0 0.0
        %736 = vmatpush.msra.mxu0 0.0
        %737 = vmatpush.msra.mxu0 0.0
        %738 = vmatpush.msra.mxu0 0.0
        %739 = vmatpush.msra.mxu0 0.0
        %740 = vmatpush.msra.mxu0 0.0
        %741 = vmatpush.msra.mxu0 0.0
        %742 = vmatpush.msra.mxu0 0.0
        %743 = vmatpush.msra.mxu0 0.0
        %744 = vmatpush.msra.mxu0 0.0
        %745 = vmatpush.msra.mxu0 0.0
        %746 = vmatpush.msra.mxu0 0.0
        %747 = vmatpush.msra.mxu0 0.0
        %748 = vmatpush.msra.mxu0 0.0
        %749 = vmatpush.msra.mxu0 0.0
        %750 = vmatpush.msra.mxu0 %v730
        %751 = vmatmul.f32.gmra.mxu0 %v733
        %v752 = vpop.f32.mrf.mxu0
        %v753 = vadd.f32 0.0, %v752
        %754 = vdwg.mxu0
        %756 = vrot.lane.b32.xlu0 %v701, 8
        %v757 = vpop.permute.xlu0 %756
        %760 = vrot.lane.b32.xlu0 %v727, 16
        %v761 = vpop.permute.xlu0 %760
        %764 = vrot.lane.b32.xlu0 %v753, 24
        %v765 = vpop.permute.xlu0 %764
        %v767 = vsel %vm441, %v675, %v757
        %vm768 = vcmask 130048
        %v769 = vsel %vm768, %v767, %v761
        %vm770 = vcmask 195584
        %v771 = vsel %vm770, %v769, %v765
        %v772 = vld [vmem:[%s4] sm:$0xff]
        %v773 = vld [vmem:[%s4 + $0x8] sm:$0xff]
        %v774 = vld [vmem:[%s4 + $0x10] sm:$0xff]
        %v775 = vld [vmem:[%s4 + $0x18] sm:$0xff]
        %v776 = vperm.slane %v403, 1
        %v778 = vsel %vm369, %v771, 0
        %780 = vmatpush.msra.mxu0 0.0
        %781 = vmatpush.msra.mxu0 0.0
        %782 = vmatpush.msra.mxu0 0.0
        %783 = vmatpush.msra.mxu0 0.0
        %784 = vmatpush.msra.mxu0 0.0
        %785 = vmatpush.msra.mxu0 0.0
        %786 = vmatpush.msra.mxu0 0.0
        %787 = vmatpush.msra.mxu0 0.0
        %788 = vmatpush.msra.mxu0 0.0
        %789 = vmatpush.msra.mxu0 0.0
        %790 = vmatpush.msra.mxu0 0.0
        %791 = vmatpush.msra.mxu0 0.0
        %792 = vmatpush.msra.mxu0 %v775
        %793 = vmatpush.msra.mxu0 %v774
        %794 = vmatpush.msra.mxu0 %v773
        %795 = vmatpush.msra.mxu0 %v772
        %796 = vmatmul.f32.gmra.mxu0 %v778
        %v797 = vpop.f32.mrf.mxu0
        %v798 = vadd.f32 %v776, %v797
        %799 = vdwg.mxu0
        %v800 = vadd.f32 %v798, %v402
        %v801 = vsel %vm369, %v800, 0.0
        %802 = vadd.xlane.f32.xlu0 %v801
        %v803 = vpop.xlane.xlu0 %802
        %v804 = vmul.f32 %v803, %v379
        %v805 = vsub.f32 %v800, %v804
        %v806 = vmul.f32 %v805, %v805
        %v807 = vsel %vm369, %v806, 0.0
        %808 = vadd.xlane.f32.xlu0 %v807
        %v809 = vpop.xlane.xlu0 %808
        %v810 = vmul.f32 %v809, %v379
        %v811 = vadd.f32 %v810, 1e-12
        %v812 = vrsqrt.pop %v811
        %v813 = vmul.f32 %v812, %v811
        %v814 = vmul.f32 %v813, %v812
        %v815 = vmul.f32 0.5, %v814
        %v816 = vsub.f32 1.5, %v815
        %v817 = vmul.f32 %v812, %v816
        %vm818 = vweird.f32 %v811
        %vm819 = vweird.f32 %v812
        %vm820 = vmor %vm818, %vm819
        %v821 = vsel %vm820, %v812, %v817
        %v822 = vmul.f32 %v805, %v821
        %v823 = vperm.slane %v403, 2
        %v824 = vmul.f32 %v822, %v823
        %v825 = vperm.slane %v403, 3
        %v826 = vadd.f32 %v824, %v825
        %v827 = vld [vmem:[%s5] sm:$0xff]
        %v828 = vld [vmem:[%s5 + $0x8] sm:$0xff]
        %v829 = vld [vmem:[%s5 + $0x10] sm:$0xff]
        %v830 = vld [vmem:[%s5 + $0x18] sm:$0xff]
        %v831 = vperm.slane %v403, 4
        %v833 = vsel %vm369, %v826, 0
        %835 = vmatpush.msra.mxu0 0.0
        %836 = vmatpush.msra.mxu0 0.0
        %837 = vmatpush.msra.mxu0 0.0
        %838 = vmatpush.msra.mxu0 0.0
        %839 = vmatpush.msra.mxu0 0.0
        %840 = vmatpush.msra.mxu0 0.0
        %841 = vmatpush.msra.mxu0 0.0
        %842 = vmatpush.msra.mxu0 0.0
        %843 = vmatpush.msra.mxu0 0.0
        %844 = vmatpush.msra.mxu0 0.0
        %845 = vmatpush.msra.mxu0 0.0
        %846 = vmatpush.msra.mxu0 0.0
        %847 = vmatpush.msra.mxu0 %v830
        %848 = vmatpush.msra.mxu0 %v829
        %849 = vmatpush.msra.mxu0 %v828
        %850 = vmatpush.msra.mxu0 %v827
        %851 = vmatmul.f32.gmra.mxu0 %v833
        %v852 = vpop.f32.mrf.mxu0
        %v853 = vadd.f32 %v831, %v852
        %854 = vdwg.mxu0
        %v855 = vlaneseq
        %v856 = vand.u32 %v855, 127
        %vm857 = vcmp.lt.s32.totalorder %v856, 64
        %v858 = vmul.f32 %v853, %v853
        %v859 = vmul.f32 %v853, %v858
        %v860 = vmul.f32 %v859, 0.044715
        %v861 = vadd.f32 %v853, %v860
        %v862 = vmul.f32 %v861, 0.7978846
        %v863 = vtanh.pop %v862
        %v864 = vadd.f32 %v863, 1.0
        %v865 = vmul.f32 %v864, 0.5
        %v866 = vmul.f32 %v853, %v865
        %v867 = vmax.f32 %v853, 0.0
        %v868 = vsel %vm857, %v866, %v867
        %v869 = vld [vmem:[%s6] sm:$0xff]
        %v870 = vld [vmem:[%s6 + $0x8] sm:$0xff]
        %v871 = vld [vmem:[%s6 + $0x10] sm:$0xff]
        %v872 = vld [vmem:[%s6 + $0x18] sm:$0xff]
        %v873 = vld [vmem:[%s6 + $0x20] sm:$0xff]
        %v874 = vld [vmem:[%s6 + $0x28] sm:$0xff]
        %v875 = vld [vmem:[%s6 + $0x30] sm:$0xff]
        %v876 = vld [vmem:[%s6 + $0x38] sm:$0xff]
        %v877 = vld [vmem:[%s6 + $0x40] sm:$0xff]
        %v878 = vperm.slane %v403, 5
        %vm879 = vcmask 588800
        %v881 = vsel %vm879, %v868, 0
        %883 = vmatpush.msra.mxu0 0.0
        %884 = vmatpush.msra.mxu0 0.0
        %885 = vmatpush.msra.mxu0 0.0
        %886 = vmatpush.msra.mxu0 0.0
        %887 = vmatpush.msra.mxu0 0.0
        %888 = vmatpush.msra.mxu0 0.0
        %889 = vmatpush.msra.mxu0 0.0
        %890 = vmatpush.msra.mxu0 %v877
        %891 = vmatpush.msra.mxu0 %v876
        %892 = vmatpush.msra.mxu0 %v875
        %893 = vmatpush.msra.mxu0 %v874
        %894 = vmatpush.msra.mxu0 %v873
        %895 = vmatpush.msra.mxu0 %v872
        %896 = vmatpush.msra.mxu0 %v871
        %897 = vmatpush.msra.mxu0 %v870
        %898 = vmatpush.msra.mxu0 %v869
        %899 = vmatmul.f32.gmra.mxu0 %v881
        %v900 = vpop.f32.mrf.mxu0
        %v901 = vadd.f32 %v878, %v900
        %902 = vdwg.mxu0
        %v903 = vadd.f32 %v901, %v826
        %v904 = vsel %vm369, %v903, 0.0
        %905 = vadd.xlane.f32.xlu0 %v904
        %v906 = vpop.xlane.xlu0 %905
        %v907 = vmul.f32 %v906, %v379
        %v908 = vsub.f32 %v903, %v907
        %v909 = vmul.f32 %v908, %v908
        %v910 = vsel %vm369, %v909, 0.0
        %911 = vadd.xlane.f32.xlu0 %v910
        %v912 = vpop.xlane.xlu0 %911
        %v913 = vmul.f32 %v912, %v379
        %v914 = vadd.f32 %v913, 1e-12
        %v915 = vrsqrt.pop %v914
        %v916 = vmul.f32 %v915, %v914
        %v917 = vmul.f32 %v916, %v915
        %v918 = vmul.f32 0.5, %v917
        %v919 = vsub.f32 1.5, %v918
        %v920 = vmul.f32 %v915, %v919
        %vm921 = vweird.f32 %v914
        %vm922 = vweird.f32 %v915
        %vm923 = vmor %vm921, %vm922
        %v924 = vsel %vm923, %v915, %v920
        %v925 = vmul.f32 %v908, %v924
        %v926 = vperm.slane %v403, 6
        %v927 = vmul.f32 %v925, %v926
        %v928 = vperm.slane %v403, 7
        %v929 = vadd.f32 %v927, %v928
        %s930 = scalar_lea.vmem [#allocation7], 8
        %v931 = vld [vmem:[%s930] sm:$0xff]
        %s932 = scalar_lea.vmem %s3, 32
        %v933 = vld [vmem:[%s932] sm:$0xff]
        %v934 = vld [vmem:[%s932 + $0x8] sm:$0xff]
        %v935 = vld [vmem:[%s932 + $0x10] sm:$0xff]
        %v936 = vld [vmem:[%s932 + $0x18] sm:$0xff]
        %v937 = vperm.slane %v931, 0
        %v939 = vsel %vm369, %v929, 0
        %941 = vmatpush.msra.mxu0 0.0
        %942 = vmatpush.msra.mxu0 0.0
        %943 = vmatpush.msra.mxu0 0.0
        %944 = vmatpush.msra.mxu0 0.0
        %945 = vmatpush.msra.mxu0 0.0
        %946 = vmatpush.msra.mxu0 0.0
        %947 = vmatpush.msra.mxu0 0.0
        %948 = vmatpush.msra.mxu0 0.0
        %949 = vmatpush.msra.mxu0 0.0
        %950 = vmatpush.msra.mxu0 0.0
        %951 = vmatpush.msra.mxu0 0.0
        %952 = vmatpush.msra.mxu0 0.0
        %953 = vmatpush.msra.mxu0 %v936
        %954 = vmatpush.msra.mxu0 %v935
        %955 = vmatpush.msra.mxu0 %v934
        %956 = vmatpush.msra.mxu0 %v933
        %957 = vmatmul.f32.gmra.mxu0 %v939
        %v958 = vpop.f32.mrf.mxu0
        %v959 = vadd.f32 %v937, %v958
        %960 = vdwg.mxu0
        %962 = vrot.lane.b32.xlu0 %v959, 120
        %v963 = vpop.permute.xlu0 %962
        %964 = vrot.lane.b32.xlu0 %v959, 112
        %v965 = vpop.permute.xlu0 %964
        %966 = vrot.lane.b32.xlu0 %v959, 104
        %v967 = vpop.permute.xlu0 %966
        %968 = vrot.lane.b32.xlu0 %v959, 96
        %v969 = vpop.permute.xlu0 %968
        %v970 = vsel %vm441, %v959, 0
        %v972 = vsel %vm441, %v969, 0
        %974 = vmatpush.xpose.msra.mxu0 0.0
        %975 = vmatpush.xpose.msra.mxu0 0.0
        %976 = vmatpush.xpose.msra.mxu0 0.0
        %977 = vmatpush.xpose.msra.mxu0 0.0
        %978 = vmatpush.xpose.msra.mxu0 0.0
        %979 = vmatpush.xpose.msra.mxu0 0.0
        %980 = vmatpush.xpose.msra.mxu0 0.0
        %981 = vmatpush.xpose.msra.mxu0 0.0
        %982 = vmatpush.xpose.msra.mxu0 0.0
        %983 = vmatpush.xpose.msra.mxu0 0.0
        %984 = vmatpush.xpose.msra.mxu0 0.0
        %985 = vmatpush.xpose.msra.mxu0 0.0
        %986 = vmatpush.xpose.msra.mxu0 0.0
        %987 = vmatpush.xpose.msra.mxu0 0.0
        %988 = vmatpush.xpose.msra.mxu0 0.0
        %989 = vmatpush.xpose.msra.mxu0 %v972
        %990 = vmatmul.f32.gmra.mxu0 %v970
        %v991 = vpop.f32.mrf.mxu0
        %v992 = vadd.f32 0.0, %v991
        %993 = vdwg.mxu0
        %994 = vrot.lane.b32.xlu0 %v963, 96
        %v995 = vpop.permute.xlu0 %994
        %v996 = vsel %vm441, %v963, 0
        %v998 = vsel %vm441, %v995, 0
        %1000 = vmatpush.xpose.msra.mxu0 0.0
        %1001 = vmatpush.xpose.msra.mxu0 0.0
        %1002 = vmatpush.xpose.msra.mxu0 0.0
        %1003 = vmatpush.xpose.msra.mxu0 0.0
        %1004 = vmatpush.xpose.msra.mxu0 0.0
        %1005 = vmatpush.xpose.msra.mxu0 0.0
        %1006 = vmatpush.xpose.msra.mxu0 0.0
        %1007 = vmatpush.xpose.msra.mxu0 0.0
        %1008 = vmatpush.xpose.msra.mxu0 0.0
        %1009 = vmatpush.xpose.msra.mxu0 0.0
        %1010 = vmatpush.xpose.msra.mxu0 0.0
        %1011 = vmatpush.xpose.msra.mxu0 0.0
        %1012 = vmatpush.xpose.msra.mxu0 0.0
        %1013 = vmatpush.xpose.msra.mxu0 0.0
        %1014 = vmatpush.xpose.msra.mxu0 0.0
        %1015 = vmatpush.xpose.msra.mxu0 %v998
        %1016 = vmatmul.f32.gmra.mxu0 %v996
        %v1017 = vpop.f32.mrf.mxu0
        %v1018 = vadd.f32 0.0, %v1017
        %1019 = vdwg.mxu0
        %1020 = vrot.lane.b32.xlu0 %v965, 96
        %v1021 = vpop.permute.xlu0 %1020
        %v1022 = vsel %vm441, %v965, 0
        %v1024 = vsel %vm441, %v1021, 0
        %1026 = vmatpush.xpose.msra.mxu0 0.0
        %1027 = vmatpush.xpose.msra.mxu0 0.0
        %1028 = vmatpush.xpose.msra.mxu0 0.0
        %1029 = vmatpush.xpose.msra.mxu0 0.0
        %1030 = vmatpush.xpose.msra.mxu0 0.0
        %1031 = vmatpush.xpose.msra.mxu0 0.0
        %1032 = vmatpush.xpose.msra.mxu0 0.0
        %1033 = vmatpush.xpose.msra.mxu0 0.0
        %1034 = vmatpush.xpose.msra.mxu0 0.0
        %1035 = vmatpush.xpose.msra.mxu0 0.0
        %1036 = vmatpush.xpose.msra.mxu0 0.0
        %1037 = vmatpush.xpose.msra.mxu0 0.0
        %1038 = vmatpush.xpose.msra.mxu0 0.0
        %1039 = vmatpush.xpose.msra.mxu0 0.0
        %1040 = vmatpush.xpose.msra.mxu0 0.0
        %1041 = vmatpush.xpose.msra.mxu0 %v1024
        %1042 = vmatmul.f32.gmra.mxu0 %v1022
        %v1043 = vpop.f32.mrf.mxu0
        %v1044 = vadd.f32 0.0, %v1043
        %1045 = vdwg.mxu0
        %1046 = vrot.lane.b32.xlu0 %v967, 96
        %v1047 = vpop.permute.xlu0 %1046
        %v1048 = vsel %vm441, %v967, 0
        %v1050 = vsel %vm441, %v1047, 0
        %1052 = vmatpush.xpose.msra.mxu0 0.0
        %1053 = vmatpush.xpose.msra.mxu0 0.0
        %1054 = vmatpush.xpose.msra.mxu0 0.0
        %1055 = vmatpush.xpose.msra.mxu0 0.0
        %1056 = vmatpush.xpose.msra.mxu0 0.0
        %1057 = vmatpush.xpose.msra.mxu0 0.0
        %1058 = vmatpush.xpose.msra.mxu0 0.0
        %1059 = vmatpush.xpose.msra.mxu0 0.0
        %1060 = vmatpush.xpose.msra.mxu0 0.0
        %1061 = vmatpush.xpose.msra.mxu0 0.0
        %1062 = vmatpush.xpose.msra.mxu0 0.0
        %1063 = vmatpush.xpose.msra.mxu0 0.0
        %1064 = vmatpush.xpose.msra.mxu0 0.0
        %1065 = vmatpush.xpose.msra.mxu0 0.0
        %1066 = vmatpush.xpose.msra.mxu0 0.0
        %1067 = vmatpush.xpose.msra.mxu0 %v1050
        %1068 = vmatmul.f32.gmra.mxu0 %v1048
        %v1069 = vpop.f32.mrf.mxu0
        %v1070 = vadd.f32 0.0, %v1069
        %1071 = vdwg.mxu0
        %v1072 = vmul.f32 %v992, 0.35355338
        %v1073 = vmul.f32 %v1018, 0.35355338
        %v1074 = vmul.f32 %v1044, 0.35355338
        %v1075 = vmul.f32 %v1070, 0.35355338
        %v1076 = vadd.f32 %v1072, %v549
        %v1077 = vadd.f32 %v1073, %v549
        %v1078 = vadd.f32 %v1074, %v549
        %v1079 = vadd.f32 %v1075, %v549
        %v1080 = vsel %vm441, %v1076, -inf
        %1081 = vmax.xlane.f32.xlu0 %v1080
        %v1082 = vpop.xlane.xlu0 %1081
        %v1083 = vsel %vm441, %v1077, -inf
        %1084 = vmax.xlane.f32.xlu0 %v1083
        %v1085 = vpop.xlane.xlu0 %1084
        %v1086 = vsel %vm441, %v1078, -inf
        %1087 = vmax.xlane.f32.xlu0 %v1086
        %v1088 = vpop.xlane.xlu0 %1087
        %v1089 = vsel %vm441, %v1079, -inf
        %1090 = vmax.xlane.f32.xlu0 %v1089
        %v1091 = vpop.xlane.xlu0 %1090
        %v1092 = vsub.f32 %v1076, %v1082
        %v1093 = vsub.f32 %v1077, %v1085
        %v1094 = vsub.f32 %v1078, %v1088
        %v1095 = vsub.f32 %v1079, %v1091
        %v1096 = vmul.f32 %v1092, 1.442695
        %v1097 = vpow.pop %v1096
        %v1098 = vmul.f32 %v1093, 1.442695
        %v1099 = vpow.pop %v1098
        %v1100 = vmul.f32 %v1094, 1.442695
        %v1101 = vpow.pop %v1100
        %v1102 = vmul.f32 %v1095, 1.442695
        %v1103 = vpow.pop %v1102
        %v1104 = vsel %vm441, %v1097, 0.0
        %1105 = vadd.xlane.f32.xlu0 %v1104
        %v1106 = vpop.xlane.xlu0 %1105
        %v1107 = vsel %vm441, %v1099, 0.0
        %1108 = vadd.xlane.f32.xlu0 %v1107
        %v1109 = vpop.xlane.xlu0 %1108
        %v1110 = vsel %vm441, %v1101, 0.0
        %1111 = vadd.xlane.f32.xlu0 %v1110
        %v1112 = vpop.xlane.xlu0 %1111
        %v1113 = vsel %vm441, %v1103, 0.0
        %1114 = vadd.xlane.f32.xlu0 %v1113
        %v1115 = vpop.xlane.xlu0 %1114
        %v1116 = vrcp.pop %v1106
        %v1117 = vmul.f32 %v1106, %v1116
        %v1118 = vsub.f32 1.0, %v1117
        %v1119 = vmul.f32 %v1116, %v1118
        %v1120 = vadd.f32 %v1116, %v1119
        %vm1121 = vweird.f32 %v1106
        %vm1122 = vweird.f32 %v1116
        %vm1123 = vmor %vm1121, %vm1122
        %v1124 = vsel %vm1123, %v1116, %v1120
        %v1125 = vand.u32 2147483647, %v1106
        %vm1126 = vcmp.eq.f32.partialorder %v1125, 8.507059e+37
        %v1127 = vand.u32 %v1106, 2147483648
        %v1128 = vor.u32 1.1754944e-38, %v1127
        %v1129 = vsel %vm1126, %v1128, %v1124
        %v1130 = vmul.f32 %v1097, %v1129
        %v1131 = vrcp.pop %v1109
        %v1132 = vmul.f32 %v1109, %v1131
        %v1133 = vsub.f32 1.0, %v1132
        %v1134 = vmul.f32 %v1131, %v1133
        %v1135 = vadd.f32 %v1131, %v1134
        %vm1136 = vweird.f32 %v1109
        %vm1137 = vweird.f32 %v1131
        %vm1138 = vmor %vm1136, %vm1137
        %v1139 = vsel %vm1138, %v1131, %v1135
        %v1140 = vand.u32 2147483647, %v1109
        %vm1141 = vcmp.eq.f32.partialorder %v1140, 8.507059e+37
        %v1142 = vand.u32 %v1109, 2147483648
        %v1143 = vor.u32 1.1754944e-38, %v1142
        %v1144 = vsel %vm1141, %v1143, %v1139
        %v1145 = vmul.f32 %v1099, %v1144
        %v1146 = vrcp.pop %v1112
        %v1147 = vmul.f32 %v1112, %v1146
        %v1148 = vsub.f32 1.0, %v1147
        %v1149 = vmul.f32 %v1146, %v1148
        %v1150 = vadd.f32 %v1146, %v1149
        %vm1151 = vweird.f32 %v1112
        %vm1152 = vweird.f32 %v1146
        %vm1153 = vmor %vm1151, %vm1152
        %v1154 = vsel %vm1153, %v1146, %v1150
        %v1155 = vand.u32 2147483647, %v1112
        %vm1156 = vcmp.eq.f32.partialorder %v1155, 8.507059e+37
        %v1157 = vand.u32 %v1112, 2147483648
        %v1158 = vor.u32 1.1754944e-38, %v1157
        %v1159 = vsel %vm1156, %v1158, %v1154
        %v1160 = vmul.f32 %v1101, %v1159
        %v1161 = vrcp.pop %v1115
        %v1162 = vmul.f32 %v1115, %v1161
        %v1163 = vsub.f32 1.0, %v1162
        %v1164 = vmul.f32 %v1161, %v1163
        %v1165 = vadd.f32 %v1161, %v1164
        %vm1166 = vweird.f32 %v1115
        %vm1167 = vweird.f32 %v1161
        %vm1168 = vmor %vm1166, %vm1167
        %v1169 = vsel %vm1168, %v1161, %v1165
        %v1170 = vand.u32 2147483647, %v1115
        %vm1171 = vcmp.eq.f32.partialorder %v1170, 8.507059e+37
        %v1172 = vand.u32 %v1115, 2147483648
        %v1173 = vor.u32 1.1754944e-38, %v1172
        %v1174 = vsel %vm1171, %v1173, %v1169
        %v1175 = vmul.f32 %v1103, %v1174
        %1176 = vrot.lane.b32.xlu0 %v959, 64
        %v1177 = vpop.permute.xlu0 %1176
        %v1180 = vsel %vm441, %v1130, 0
        %1182 = vmatpush.msra.mxu0 0.0
        %1183 = vmatpush.msra.mxu0 0.0
        %1184 = vmatpush.msra.mxu0 0.0
        %1185 = vmatpush.msra.mxu0 0.0
        %1186 = vmatpush.msra.mxu0 0.0
        %1187 = vmatpush.msra.mxu0 0.0
        %1188 = vmatpush.msra.mxu0 0.0
        %1189 = vmatpush.msra.mxu0 0.0
        %1190 = vmatpush.msra.mxu0 0.0
        %1191 = vmatpush.msra.mxu0 0.0
        %1192 = vmatpush.msra.mxu0 0.0
        %1193 = vmatpush.msra.mxu0 0.0
        %1194 = vmatpush.msra.mxu0 0.0
        %1195 = vmatpush.msra.mxu0 0.0
        %1196 = vmatpush.msra.mxu0 0.0
        %1197 = vmatpush.msra.mxu0 %v1177
        %1198 = vmatmul.f32.gmra.mxu0 %v1180
        %v1199 = vpop.f32.mrf.mxu0
        %v1200 = vadd.f32 0.0, %v1199
        %1201 = vdwg.mxu0
        %1202 = vrot.lane.b32.xlu0 %v963, 64
        %v1203 = vpop.permute.xlu0 %1202
        %v1206 = vsel %vm441, %v1145, 0
        %1208 = vmatpush.msra.mxu0 0.0
        %1209 = vmatpush.msra.mxu0 0.0
        %1210 = vmatpush.msra.mxu0 0.0
        %1211 = vmatpush.msra.mxu0 0.0
        %1212 = vmatpush.msra.mxu0 0.0
        %1213 = vmatpush.msra.mxu0 0.0
        %1214 = vmatpush.msra.mxu0 0.0
        %1215 = vmatpush.msra.mxu0 0.0
        %1216 = vmatpush.msra.mxu0 0.0
        %1217 = vmatpush.msra.mxu0 0.0
        %1218 = vmatpush.msra.mxu0 0.0
        %1219 = vmatpush.msra.mxu0 0.0
        %1220 = vmatpush.msra.mxu0 0.0
        %1221 = vmatpush.msra.mxu0 0.0
        %1222 = vmatpush.msra.mxu0 0.0
        %1223 = vmatpush.msra.mxu0 %v1203
        %1224 = vmatmul.f32.gmra.mxu0 %v1206
        %v1225 = vpop.f32.mrf.mxu0
        %v1226 = vadd.f32 0.0, %v1225
        %1227 = vdwg.mxu0
        %1228 = vrot.lane.b32.xlu0 %v965, 64
        %v1229 = vpop.permute.xlu0 %1228
        %v1232 = vsel %vm441, %v1160, 0
        %1234 = vmatpush.msra.mxu0 0.0
        %1235 = vmatpush.msra.mxu0 0.0
        %1236 = vmatpush.msra.mxu0 0.0
        %1237 = vmatpush.msra.mxu0 0.0
        %1238 = vmatpush.msra.mxu0 0.0
        %1239 = vmatpush.msra.mxu0 0.0
        %1240 = vmatpush.msra.mxu0 0.0
        %1241 = vmatpush.msra.mxu0 0.0
        %1242 = vmatpush.msra.mxu0 0.0
        %1243 = vmatpush.msra.mxu0 0.0
        %1244 = vmatpush.msra.mxu0 0.0
        %1245 = vmatpush.msra.mxu0 0.0
        %1246 = vmatpush.msra.mxu0 0.0
        %1247 = vmatpush.msra.mxu0 0.0
        %1248 = vmatpush.msra.mxu0 0.0
        %1249 = vmatpush.msra.mxu0 %v1229
        %1250 = vmatmul.f32.gmra.mxu0 %v1232
        %v1251 = vpop.f32.mrf.mxu0
        %v1252 = vadd.f32 0.0, %v1251
        %1253 = vdwg.mxu0
        %1254 = vrot.lane.b32.xlu0 %v967, 64
        %v1255 = vpop.permute.xlu0 %1254
        %v1258 = vsel %vm441, %v1175, 0
        %1260 = vmatpush.msra.mxu0 0.0
        %1261 = vmatpush.msra.mxu0 0.0
        %1262 = vmatpush.msra.mxu0 0.0
        %1263 = vmatpush.msra.mxu0 0.0
        %1264 = vmatpush.msra.mxu0 0.0
        %1265 = vmatpush.msra.mxu0 0.0
        %1266 = vmatpush.msra.mxu0 0.0
        %1267 = vmatpush.msra.mxu0 0.0
        %1268 = vmatpush.msra.mxu0 0.0
        %1269 = vmatpush.msra.mxu0 0.0
        %1270 = vmatpush.msra.mxu0 0.0
        %1271 = vmatpush.msra.mxu0 0.0
        %1272 = vmatpush.msra.mxu0 0.0
        %1273 = vmatpush.msra.mxu0 0.0
        %1274 = vmatpush.msra.mxu0 0.0
        %1275 = vmatpush.msra.mxu0 %v1255
        %1276 = vmatmul.f32.gmra.mxu0 %v1258
        %v1277 = vpop.f32.mrf.mxu0
        %v1278 = vadd.f32 0.0, %v1277
        %1279 = vdwg.mxu0
        %1281 = vrot.lane.b32.xlu0 %v1226, 8
        %v1282 = vpop.permute.xlu0 %1281
        %1285 = vrot.lane.b32.xlu0 %v1252, 16
        %v1286 = vpop.permute.xlu0 %1285
        %1289 = vrot.lane.b32.xlu0 %v1278, 24
        %v1290 = vpop.permute.xlu0 %1289
        %v1292 = vsel %vm441, %v1200, %v1282
        %v1293 = vsel %vm768, %v1292, %v1286
        %v1294 = vsel %vm770, %v1293, %v1290
        %s1295 = scalar_lea.vmem %s4, 32
        %v1296 = vld [vmem:[%s1295] sm:$0xff]
        %v1297 = vld [vmem:[%s1295 + $0x8] sm:$0xff]
        %v1298 = vld [vmem:[%s1295 + $0x10] sm:$0xff]
        %v1299 = vld [vmem:[%s1295 + $0x18] sm:$0xff]
        %v1300 = vperm.slane %v931, 1
        %v1302 = vsel %vm369, %v1294, 0
        %1304 = vmatpush.msra.mxu0 0.0
        %1305 = vmatpush.msra.mxu0 0.0
        %1306 = vmatpush.msra.mxu0 0.0
        %1307 = vmatpush.msra.mxu0 0.0
        %1308 = vmatpush.msra.mxu0 0.0
        %1309 = vmatpush.msra.mxu0 0.0
        %1310 = vmatpush.msra.mxu0 0.0
        %1311 = vmatpush.msra.mxu0 0.0
        %1312 = vmatpush.msra.mxu0 0.0
        %1313 = vmatpush.msra.mxu0 0.0
        %1314 = vmatpush.msra.mxu0 0.0
        %1315 = vmatpush.msra.mxu0 0.0
        %1316 = vmatpush.msra.mxu0 %v1299
        %1317 = vmatpush.msra.mxu0 %v1298
        %1318 = vmatpush.msra.mxu0 %v1297
        %1319 = vmatpush.msra.mxu0 %v1296
        %1320 = vmatmul.f32.gmra.mxu0 %v1302
        %v1321 = vpop.f32.mrf.mxu0
        %v1322 = vadd.f32 %v1300, %v1321
        %1323 = vdwg.mxu0
        %v1324 = vadd.f32 %v1322, %v929
        %v1325 = vsel %vm369, %v1324, 0.0
        %1326 = vadd.xlane.f32.xlu0 %v1325
        %v1327 = vpop.xlane.xlu0 %1326
        %v1328 = vmul.f32 %v1327, %v379
        %v1329 = vsub.f32 %v1324, %v1328
        %v1330 = vmul.f32 %v1329, %v1329
        %v1331 = vsel %vm369, %v1330, 0.0
        %1332 = vadd.xlane.f32.xlu0 %v1331
        %v1333 = vpop.xlane.xlu0 %1332
        %v1334 = vmul.f32 %v1333, %v379
        %v1335 = vadd.f32 %v1334, 1e-12
        %v1336 = vrsqrt.pop %v1335
        %v1337 = vmul.f32 %v1336, %v1335
        %v1338 = vmul.f32 %v1337, %v1336
        %v1339 = vmul.f32 0.5, %v1338
        %v1340 = vsub.f32 1.5, %v1339
        %v1341 = vmul.f32 %v1336, %v1340
        %vm1342 = vweird.f32 %v1335
        %vm1343 = vweird.f32 %v1336
        %vm1344 = vmor %vm1342, %vm1343
        %v1345 = vsel %vm1344, %v1336, %v1341
        %v1346 = vmul.f32 %v1329, %v1345
        %v1347 = vperm.slane %v931, 2
        %v1348 = vmul.f32 %v1346, %v1347
        %v1349 = vperm.slane %v931, 3
        %v1350 = vadd.f32 %v1348, %v1349
        %s1351 = scalar_lea.vmem %s5, 32
        %v1352 = vld [vmem:[%s1351] sm:$0xff]
        %v1353 = vld [vmem:[%s1351 + $0x8] sm:$0xff]
        %v1354 = vld [vmem:[%s1351 + $0x10] sm:$0xff]
        %v1355 = vld [vmem:[%s1351 + $0x18] sm:$0xff]
        %v1356 = vperm.slane %v931, 4
        %v1358 = vsel %vm369, %v1350, 0
        %1360 = vmatpush.msra.mxu0 0.0
        %1361 = vmatpush.msra.mxu0 0.0
        %1362 = vmatpush.msra.mxu0 0.0
        %1363 = vmatpush.msra.mxu0 0.0
        %1364 = vmatpush.msra.mxu0 0.0
        %1365 = vmatpush.msra.mxu0 0.0
        %1366 = vmatpush.msra.mxu0 0.0
        %1367 = vmatpush.msra.mxu0 0.0
        %1368 = vmatpush.msra.mxu0 0.0
        %1369 = vmatpush.msra.mxu0 0.0
        %1370 = vmatpush.msra.mxu0 0.0
        %1371 = vmatpush.msra.mxu0 0.0
        %1372 = vmatpush.msra.mxu0 %v1355
        %1373 = vmatpush.msra.mxu0 %v1354
        %1374 = vmatpush.msra.mxu0 %v1353
        %1375 = vmatpush.msra.mxu0 %v1352
        %1376 = vmatmul.f32.gmra.mxu0 %v1358
        %v1377 = vpop.f32.mrf.mxu0
        %v1378 = vadd.f32 %v1356, %v1377
        %1379 = vdwg.mxu0
        %v1380 = vmul.f32 %v1378, %v1378
        %v1381 = vmul.f32 %v1378, %v1380
        %v1382 = vmul.f32 %v1381, 0.044715
        %v1383 = vadd.f32 %v1378, %v1382
        %v1384 = vmul.f32 %v1383, 0.7978846
        %v1385 = vtanh.pop %v1384
        %v1386 = vadd.f32 %v1385, 1.0
        %v1387 = vmul.f32 %v1386, 0.5
        %v1388 = vmul.f32 %v1378, %v1387
        %v1389 = vmax.f32 %v1378, 0.0
        %v1390 = vsel %vm857, %v1388, %v1389
        %s1391 = scalar_lea.vmem %s6, 72
        %v1392 = vld [vmem:[%s1391] sm:$0xff]
        %v1393 = vld [vmem:[%s1391 + $0x8] sm:$0xff]
        %v1394 = vld [vmem:[%s1391 + $0x10] sm:$0xff]
        %v1395 = vld [vmem:[%s1391 + $0x18] sm:$0xff]
        %v1396 = vld [vmem:[%s1391 + $0x20] sm:$0xff]
        %v1397 = vld [vmem:[%s1391 + $0x28] sm:$0xff]
        %v1398 = vld [vmem:[%s1391 + $0x30] sm:$0xff]
        %v1399 = vld [vmem:[%s1391 + $0x38] sm:$0xff]
        %v1400 = vld [vmem:[%s1391 + $0x40] sm:$0xff]
        %v1401 = vperm.slane %v931, 5
        %v1403 = vsel %vm879, %v1390, 0
        %1405 = vmatpush.msra.mxu0 0.0
        %1406 = vmatpush.msra.mxu0 0.0
        %1407 = vmatpush.msra.mxu0 0.0
        %1408 = vmatpush.msra.mxu0 0.0
        %1409 = vmatpush.msra.mxu0 0.0
        %1410 = vmatpush.msra.mxu0 0.0
        %1411 = vmatpush.msra.mxu0 0.0
        %1412 = vmatpush.msra.mxu0 %v1400
        %1413 = vmatpush.msra.mxu0 %v1399
        %1414 = vmatpush.msra.mxu0 %v1398
        %1415 = vmatpush.msra.mxu0 %v1397
        %1416 = vmatpush.msra.mxu0 %v1396
        %1417 = vmatpush.msra.mxu0 %v1395
        %1418 = vmatpush.msra.mxu0 %v1394
        %1419 = vmatpush.msra.mxu0 %v1393
        %1420 = vmatpush.msra.mxu0 %v1392
        %1421 = vmatmul.f32.gmra.mxu0 %v1403
        %v1422 = vpop.f32.mrf.mxu0
        %v1423 = vadd.f32 %v1401, %v1422
        %1424 = vdwg.mxu0
        %v1425 = vadd.f32 %v1423, %v1350
        %v1426 = vsel %vm369, %v1425, 0.0
        %1427 = vadd.xlane.f32.xlu0 %v1426
        %v1428 = vpop.xlane.xlu0 %1427
        %v1429 = vmul.f32 %v1428, %v379
        %v1430 = vsub.f32 %v1425, %v1429
        %v1431 = vmul.f32 %v1430, %v1430
        %v1432 = vsel %vm369, %v1431, 0.0
        %1433 = vadd.xlane.f32.xlu0 %v1432
        %v1434 = vpop.xlane.xlu0 %1433
        %v1435 = vmul.f32 %v1434, %v379
        %v1436 = vadd.f32 %v1435, 1e-12
        %v1437 = vrsqrt.pop %v1436
        %v1438 = vmul.f32 %v1437, %v1436
        %v1439 = vmul.f32 %v1438, %v1437
        %v1440 = vmul.f32 0.5, %v1439
        %v1441 = vsub.f32 1.5, %v1440
        %v1442 = vmul.f32 %v1437, %v1441
        %vm1443 = vweird.f32 %v1436
        %vm1444 = vweird.f32 %v1437
        %vm1445 = vmor %vm1443, %vm1444
        %v1446 = vsel %vm1445, %v1437, %v1442
        %v1447 = vmul.f32 %v1430, %v1446
        %v1448 = vperm.slane %v931, 6
        %v1449 = vmul.f32 %v1447, %v1448
        %v1450 = vperm.slane %v931, 7
        %v1451 = vadd.f32 %v1449, %v1450
        %v1453 = vrot.slane %v366, 2
        %v1455 = vmul.f32 %v1451, %v1453
        %vm1456 = vcmask 253952
        %v1457 = vsel %vm1456, %v1455, 0.0
        %1458 = vadd.xlane.f32.xlu0 %v1457
        %v1459 = vpop.xlane.xlu0 %1458
        %v1460 = vrot.slane %v366, 3
        %v1462 = vadd.f32 %v1459, %v1460
        %v1463 = vxor.u32 %v1462, 2147483648
        %v1464 = vmul.f32 %v1463, 1.442695
        %v1465 = vpow.pop %v1464
        %v1466 = vadd.f32 %v1465, 1.0
        %v1467 = vrcp.pop %v1466
        %v1468 = vmul.f32 %v1466, %v1467
        %v1469 = vsub.f32 1.0, %v1468
        %v1470 = vmul.f32 %v1467, %v1469
        %v1471 = vadd.f32 %v1467, %v1470
        %vm1472 = vweird.f32 %v1466
        %vm1473 = vweird.f32 %v1467
        %vm1474 = vmor %vm1472, %vm1473
        %v1475 = vsel %vm1474, %v1467, %v1471
        %v1476 = vand.u32 2147483647, %v1466
        %vm1477 = vcmp.eq.f32.partialorder %v1476, 8.507059e+37
        %v1478 = vand.u32 %v1466, 2147483648
        %v1479 = vor.u32 1.1754944e-38, %v1478
        %v1480 = vsel %vm1477, %v1479, %v1475
        %v1481 = vmul.f32 1.0, %v1480
        %v1482 = vmul.f32 %v1481, 5.0
        %1483 = vrot.lane.b32.xlu0 %v549, 120
        %v1484 = vpop.permute.xlu0 %1483
        %v1486 = vsub.f32 %v1482, %v1484
        %v1487 = vmul.f32 %v1486, %v1486
        %vm1488 = vcmp.eq.s32.totalorder %v856, 0
        %vm1489 = vcmp.eq.s32.totalorder %v856, 1
        %1491 = vset.pattern.permute.xlu0 0
        %1492 = vperm.xlu0 %1491, %v1487
        %v1493 = vpop.permute.xlu0 %1492
        %v1495 = vsel %vm1489, %v1493, 0.0
        %1497 = vset.pattern.permute.xlu0 0
        %1498 = vperm.xlu0 %1497, %v1482
        %v1499 = vpop.permute.xlu0 %1498
        %v1501 = vsel %vm1488, %v1499, %v1495
        %1502 = vst [vmem:[%s361] sm:$0x1] %v1501
        %s1503 = sand.u32 %s212, 1
        %s1504 = scalar_lea.sflag [#allocation4], %s1503
        %s1505 = sand.u32 %s212, 1
        %s1506 = scalar_lea.vmem [#allocation8], %s1505
        // Predicated region
        $region65: #{tpu_custom_call.1} parent=51 // pred_check
          %p1507 = pneg %p222
        $region66: #{tpu_custom_call.1} parent=51 // pred_check_branch
          %1509 = sbr.rel (%p1507) target = $region68
        $region67: #{tpu_custom_call.1} parent=51 // pred_region
          %1511 = vsyncadd %s1504, 0
          %s1512 = scalar_lea.hbm %s8, %s26
          %s1514 = sshll.u32 %s1506, 4
          %s1515 = int_to_ptr.vmem [resolvable:$true] %s1514
          %s1516 = sshll.u32 %s1512, 4
          %s1517 = int_to_ptr.hbm [resolvable:$true] %s1516
          %1519 = dma.vmem_to_hbm [thread:$0]  %s1515, 16, %s1517, %s1504
        $region68: #{tpu_custom_call.1} parent=51 // pred_fallthru
          _
      $region52: #{tpu_custom_call.1} parent=5 // pred_fallthru
        _
      %p1520 = scmp.le.s32.totalorder 2, %s21
      // Predicated region
      $region69: #{tpu_custom_call.1} parent=5 // pred_check
        %p1521 = pneg %p1520
      $region70: #{tpu_custom_call.1} parent=5 // pred_check_branch
        %1523 = sbr.rel (%p1521) target = $region72
      $region71: #{tpu_custom_call.1} parent=5 // pred_region
        %s1524 = ssub.s32 %s21, 2
        // Predicated region
        $region73: #{tpu_custom_call.1} parent=71 // pred_check
          %p1525 = pneg %p228
        $region74: #{tpu_custom_call.1} parent=71 // pred_check_branch
          %1527 = sbr.rel (%p1525) target = $region76
        $region75: #{tpu_custom_call.1} parent=71 // pred_region
          %s1528 = sand.u32 %s213, 1
          %s1529 = scalar_lea.sflag [#allocation4], %s1528
          %s1530 = sand.u32 %s213, 1
          %s1531 = scalar_lea.vmem [#allocation8], %s1530
          %1533 = dma.done %s1529, 16
        $region76: #{tpu_custom_call.1} parent=71 // pred_fallthru
          _
      $region72: #{tpu_custom_call.1} parent=5 // pred_fallthru
        _
    $region6: #{tpu_custom_call.1} parent=1 // loop_footer
      %s25 = sadd.s32 1, %s21
    $region7: #{tpu_custom_call.1} parent=1 // loop_footer_branch
      %20 = sbr.rel target = $region3
    $region8: #{tpu_custom_call.1} parent=1 // loop_exit
      _
    %1534 = vsyncpa [#allocation3], 1
    %s1535 = scalar_lea.sflag [#allocation3], 1
    %1536 = vsyncpa %s1535, 1
    %1537 = vsyncpa [#allocation6], 1
    %1538 = vsyncpa [#allocation4], 1
    %s1539 = scalar_lea.sflag [#allocation4], 1
    %1540 = vsyncpa %s1539, 1

</llo_original>
